<compile_context>
chip_gen: v6e
topology: v6e:2x2x1
jax: 0.10.0
libtpu: 0.0.40
codegen_flags: <defaults>
</compile_context>

<pallas_src>
import functools

import jax
import jax.numpy as jnp
import numpy as np
from jax.experimental import pallas as pl
from jax.experimental.pallas import tpu as pltpu


# ----------------------------------------------------------------------------
# Kernel: one grid step = TH output rows x one Cout tile, ks*ks accumulating dots.
# ----------------------------------------------------------------------------
def _dc_down_kernel(planes_ref, w_ref, b_ref, o_ref, *, ks, th, wo, cin):
    """
    planes_ref: (2*ks, TH, Wo+1, Cin) bf16  tap planes (row-variant kh, col parity)
    w_ref     : (ks*ks, Cin, TCout)   bf16  folded effective weights (tap-major)
    b_ref     : (1, TCout)            f32
    o_ref     : (1, TH*Wo, TCout)           flattened output tile
    """
    acc = None
    for kh in range(ks):
        for kw in range(ks):
            v = kh * 2 + (kw % 2)                              # tap-plane index
            # NOTE: pl.ds(1, wo) on the sublane dim costs a shift-relayout for
            # half the taps; acceptable unless the ld/st slot is binding.
            tap = planes_ref[v, :, pl.ds(kw // 2, wo), :]      # (TH, Wo, Cin)
            contrib = jnp.dot(tap.reshape(th * wo, cin), w_ref[kh * ks + kw],
                              preferred_element_type=jnp.float32)
            acc = contrib if acc is None else acc + contrib
    o_ref[0] = (acc + b_ref[...]).astype(o_ref.dtype)


# ----------------------------------------------------------------------------
# Parameter algebra: fold conv + pixel_unshuffle + shortcut mean into weights.
# ----------------------------------------------------------------------------
def _build_effective_weights(conv_weight, conv_bias, *, in_channels, out_channels,
                             downsample, shortcut):
    factor = 2
    ks = 4 if downsample else 3
    cin, cout = in_channels, out_channels
    w_hwio = jnp.transpose(conv_weight, (2, 3, 1, 0)).astype(jnp.float32)  # (3,3,Cin,Cconv)

    if downsample:
        # out channel c*4 + dh*2 + dw  <-  conv output at (2ho+dh, 2wo+dw)
        cconv = cout // (factor * factor)
        w5 = jnp.zeros((ks, ks, cin, cconv, factor * factor), jnp.float32)
        for dh in range(factor):
            for dw in range(factor):
                w5 = w5.at[dh:dh + 3, dw:dw + 3, :, :, dh * factor + dw].set(w_hwio)
        w_eff = w5.reshape(ks, ks, cin, cout)
        b_eff = jnp.repeat(conv_bias.astype(jnp.float32), factor * factor)   # (Cout,)
        # TODO(synk): the zero-padded 4x4 fold does 16/9 of the strictly necessary
        # MXU FLOPs; split into 4 true 3x3 sub-convs if v5e turns compute-bound.
    else:
        w_eff = w_hwio                                   # (3,3,Cin,Cout)
        b_eff = conv_bias.astype(jnp.float32)

    if shortcut:
        assert (cin * factor * factor) % cout == 0
        group_size = cin * factor * factor // cout
        inv_g = 1.0 / group_size
        ws = np.zeros((ks, ks, cin, cout), np.float32)
        c = np.arange(cin)
        for dh in range(factor):
            for dw in range(factor):
                o = (c * factor * factor + dh * factor + dw) // group_size
                # original pixel (2ho+dh, 2wo+dw) == padded tap (dh+1, dw+1)
                ws[1 + dh, 1 + dw, c, o] += inv_g
        w_eff = w_eff + jnp.asarray(ws)

    return (w_eff.reshape(ks * ks, cin, cout).astype(jnp.bfloat16),
            b_eff.reshape(1, cout), ks)


# ----------------------------------------------------------------------------
# Tiling / VMEM sizing helpers.
# ----------------------------------------------------------------------------
def _vmem_capacity_bytes():
    try:
        return int(pltpu.get_tpu_info().vmem_capacity_bytes)
    except Exception:
        return 64 * 1024 * 1024          # v7x has the smallest VMEM; be conservative


def _pick_tiles(*, ho, wo, cin, cout, ks, out_itemsize, vmem_cap):
    # Cout tile: keep the folded-weight block small (v7x VMEM) but lane-dense.
    if cout > 256 and cout % 256 == 0:
        tcout = 256
    elif cout > 256 and cout % 128 == 0:
        tcout = 128
    else:
        tcout = cout

    nplanes = 2 * ks

    def working_set(th):
        planes_blk = nplanes * th * (wo + 1) * cin * 2           # bf16
        w_blk = ks * ks * cin * tcout * 2                        # bf16
        out_blk = th * wo * tcout * out_itemsize
        acc = th * wo * tcout * 4                                # f32 accumulator
        tap_tmp = 2 * th * wo * cin * 2                          # slice/reshape temps
        return 2 * (planes_blk + w_blk + out_blk) + acc + tap_tmp  # x2 double-buffering

    budget = int(0.40 * vmem_cap)
    # Keep the output block's sublane dim (TH*Wo) 8-aligned (or the full extent).
    cands = [t for t in range(1, ho + 1)
             if ho % t == 0 and ((t * wo) % 8 == 0 or t == ho)]
    fitting = [t for t in cands if working_set(t) <= budget]
    th = max(fitting) if fitting else min(cands)
    return th, tcout, working_set(th)


# ----------------------------------------------------------------------------
# Wrapper: layout plumbing (fused under jit) + pallas_call.
# ----------------------------------------------------------------------------
@functools.partial(jax.jit, static_argnames=("in_channels", "out_channels",
                                              "downsample", "shortcut"))
def dc_down_block2d_pallas(x_nchw, conv_weight, conv_bias, *, in_channels,
                           out_channels, downsample, shortcut):
    n, cin, h, w = x_nchw.shape
    assert cin == in_channels and h % 2 == 0 and w % 2 == 0
    ho, wo = h // 2, w // 2
    cout = out_channels

    w_eff, b_eff, ks = _build_effective_weights(
        conv_weight, conv_bias, in_channels=in_channels, out_channels=out_channels,
        downsample=downsample, shortcut=shortcut)

    # NCHW -> NHWC, +1 halo pad, then build the 2*ks tap planes: row variant kh
    # keeps padded rows kh, kh+2, ...; column parity keeps every other padded
    # column.  Every in-kernel tap becomes a contiguous slice of a
    # non-overlapping row tile (pure layout plumbing, fused under jit).
    x_nhwc = jnp.transpose(x_nchw, (0, 2, 3, 1)).astype(jnp.bfloat16)
    xpad = jnp.pad(x_nhwc, ((0, 0), (1, 1), (1, 1), (0, 0)))          # (N, H+2, W+2, Cin)
    variants = []
    for kh in range(ks):
        rows = jax.lax.slice_in_dim(xpad, kh, kh + 2 * ho - 1, stride=2, axis=1)
        for pc in (0, 1):
            variants.append(rows[:, :, pc::2, :])                     # (N, Ho, Wo+1, Cin)
    nplanes = 2 * ks
    planes = jnp.stack(variants, axis=1).reshape(n * nplanes, ho, wo + 1, cin)
    # TODO(synk): even-row data is duplicated across row variants (~1.5-2x input
    # bytes); an Element-indexed halo BlockSpec could remove that duplication.

    out_itemsize = jnp.dtype(x_nchw.dtype).itemsize
    vmem_cap = _vmem_capacity_bytes()
    th, tcout, ws_bytes = _pick_tiles(ho=ho, wo=wo, cin=cin, cout=cout, ks=ks,
                                      out_itemsize=out_itemsize, vmem_cap=vmem_cap)
    n_t, n_j = ho // th, cout // tcout

    in_specs = [
        pl.BlockSpec((nplanes, th, wo + 1, cin), lambda nn, t, j: (nn, t, 0, 0)),
        pl.BlockSpec((ks * ks, cin, tcout),      lambda nn, t, j: (0, 0, j)),
        pl.BlockSpec((1, tcout),                 lambda nn, t, j: (0, j)),
    ]
    out_spec = pl.BlockSpec((1, th * wo, tcout), lambda nn, t, j: (nn, t, j))

    cost = pl.CostEstimate(
        flops=2 * n * ho * wo * ks * ks * cin * cout,
        transcendentals=0,
        bytes_accessed=(planes.size * 2 + ks * ks * cin * cout * 2 + cout * 4
                        + n * ho * wo * cout * out_itemsize))

    vmem_limit = int(min(0.85 * vmem_cap, max(1.5 * ws_bytes, 32 * 1024 * 1024)))

    out_flat = pl.pallas_call(
        functools.partial(_dc_down_kernel, ks=ks, th=th, wo=wo, cin=cin),
        out_shape=jax.ShapeDtypeStruct((n, ho * wo, cout), x_nchw.dtype),
        grid=(n, n_t, n_j),          # Cout innermost: plane tile resident across j
        in_specs=in_specs,
        out_specs=out_spec,
        compiler_params=pltpu.CompilerParams(
            dimension_semantics=("parallel", "parallel", "parallel"),
            vmem_limit_bytes=vmem_limit),
        cost_estimate=cost,
    )(planes, w_eff, b_eff)

    # TODO(synk): if the consumer accepts NHWC / flattened output, drop this
    # final transpose back to NCHW (saves one full HBM pass over the output).
    return jnp.transpose(out_flat.reshape(n, ho, wo, cout), (0, 3, 1, 2))   # NCHW


# ----------------------------------------------------------------------------
# Pure-JAX reference mirroring the PyTorch forward (for verification).
# ----------------------------------------------------------------------------
def dc_down_block2d_ref(x_nchw, conv_weight, conv_bias, *, in_channels,
                        out_channels, downsample, shortcut):
    factor = 2
    stride = 1 if downsample else 2
    group_size = in_channels * factor * factor // out_channels

    x = jax.lax.conv_general_dilated(
        x_nchw, conv_weight, window_strides=(stride, stride),
        padding=((1, 1), (1, 1)),
        dimension_numbers=('NCHW', 'OIHW', 'NCHW'),
        precision=jax.lax.Precision.HIGHEST)
    x = x + conv_bias[None, :, None, None]

    def pixel_unshuffle(t, r):
        nn, c, hh, ww = t.shape
        t = t.reshape(nn, c, hh // r, r, ww // r, r)
        t = jnp.transpose(t, (0, 1, 3, 5, 2, 4))
        return t.reshape(nn, c * r * r, hh // r, ww // r)

    if downsample:
        x = pixel_unshuffle(x, factor)
    if shortcut:
        y = pixel_unshuffle(x_nchw, factor)
        nn, c, hh, ww = y.shape
        y = y.reshape(nn, c // group_size, group_size, hh, ww).mean(axis=2)
        return x + y
    return x


if __name__ == "__main__":
    N, H, W = 2, 16, 16
    configs = [
        dict(in_channels=4, out_channels=8,  downsample=True,  shortcut=True),
        dict(in_channels=4, out_channels=8,  downsample=False, shortcut=True),
        dict(in_channels=4, out_channels=16, downsample=True,  shortcut=False),
    ]

    key = jax.random.PRNGKey(0)
    for idx, cfg in enumerate(configs):
        key, k1, k2, k3 = jax.random.split(key, 4)
        cconv = cfg["out_channels"] // 4 if cfg["downsample"] else cfg["out_channels"]
        conv_weight = 0.1 * jax.random.normal(k1, (cconv, cfg["in_channels"], 3, 3), jnp.float32)
        conv_bias = 0.1 * jax.random.normal(k2, (cconv,), jnp.float32)
        x = jax.random.normal(k3, (N, cfg["in_channels"], H, W), jnp.float32)

        out = dc_down_block2d_pallas(x, conv_weight, conv_bias, **cfg)
        out = jax.block_until_ready(out)
        ref = dc_down_block2d_ref(x, conv_weight, conv_bias, **cfg)
        ref = jax.block_until_ready(ref)

        assert out.shape == (N, cfg["out_channels"], H // 2, W // 2), (idx, out.shape)
        # bf16 operands + f32 accumulation vs. f32 HIGHEST reference -> loose tol.
        np.testing.assert_allclose(np.asarray(out), np.asarray(ref), rtol=4e-2, atol=4e-2)

    print("KERNEL_OK")
</pallas_src>

<mosaic_0001>
module attributes {stable_mosaic.version = 11 : i64} {
  func.func @_dc_down_kernel(%arg0: i32, %arg1: i32, %arg2: i32, %arg3: memref<8x8x9x4xbf16, #tpu.memory_space<vmem>>, %arg4: memref<16x4x8xbf16, #tpu.memory_space<vmem>>, %arg5: memref<1x8xf32, #tpu.memory_space<vmem>>, %arg6: memref<1x64x8xf32, #tpu.memory_space<vmem>>) attributes {dimension_semantics = [#tpu.dimension_semantics<parallel>, #tpu.dimension_semantics<parallel>, #tpu.dimension_semantics<parallel>], iteration_bounds = array<i64: 2, 1, 1>, scalar_prefetch = 0 : i64, scratch_operands = 0 : i64, tpu.core_type = #tpu.core_type<tc>, window_params = [{transform_indices = @transform_0, window_bounds = array<i64: 8, 8, 9, 4>}, {transform_indices = @transform_1, window_bounds = array<i64: 16, 4, 8>}, {transform_indices = @transform_2, window_bounds = array<i64: 1, 8>}, {transform_indices = @transform_3, window_bounds = array<i64: 1, 64, 8>}]} {
    %c0 = arith.constant 0 : index
    %c0_0 = arith.constant 0 : index
    %c0_1 = arith.constant 0 : index
    %c0_2 = arith.constant 0 : index
    %0 = vector.load %arg3[%c0, %c0_0, %c0_1, %c0_2] : memref<8x8x9x4xbf16, #tpu.memory_space<vmem>>, vector<1x8x8x4xbf16>
    %1 = vector.shape_cast %0 : vector<1x8x8x4xbf16> to vector<8x8x4xbf16>
    %2 = vector.shape_cast %1 : vector<8x8x4xbf16> to vector<64x4xbf16>
    %c0_3 = arith.constant 0 : index
    %c0_4 = arith.constant 0 : index
    %c0_5 = arith.constant 0 : index
    %3 = vector.load %arg4[%c0_3, %c0_4, %c0_5] : memref<16x4x8xbf16, #tpu.memory_space<vmem>>, vector<1x4x8xbf16>
    %4 = vector.shape_cast %3 : vector<1x4x8xbf16> to vector<4x8xbf16>
    %cst = arith.constant dense<0.000000e+00> : vector<64x8xf32>
    %5 = tpu.matmul %2, %4, %cst {dimension_numbers = #tpu.dot_dimension_numbers<[1], [0], [0], [1], [0, 0, 1, 1], [], []>} : vector<64x4xbf16>, vector<4x8xbf16>, vector<64x8xf32> -> vector<64x8xf32>
    %c1 = arith.constant 1 : index
    %c0_6 = arith.constant 0 : index
    %c0_7 = arith.constant 0 : index
    %c0_8 = arith.constant 0 : index
    %6 = vector.load %arg3[%c1, %c0_6, %c0_7, %c0_8] : memref<8x8x9x4xbf16, #tpu.memory_space<vmem>>, vector<1x8x8x4xbf16>
    %7 = vector.shape_cast %6 : vector<1x8x8x4xbf16> to vector<8x8x4xbf16>
    %8 = vector.shape_cast %7 : vector<8x8x4xbf16> to vector<64x4xbf16>
    %c1_9 = arith.constant 1 : index
    %c0_10 = arith.constant 0 : index
    %c0_11 = arith.constant 0 : index
    %9 = vector.load %arg4[%c1_9, %c0_10, %c0_11] : memref<16x4x8xbf16, #tpu.memory_space<vmem>>, vector<1x4x8xbf16>
    %10 = vector.shape_cast %9 : vector<1x4x8xbf16> to vector<4x8xbf16>
    %cst_12 = arith.constant dense<0.000000e+00> : vector<64x8xf32>
    %11 = tpu.matmul %8, %10, %cst_12 {dimension_numbers = #tpu.dot_dimension_numbers<[1], [0], [0], [1], [0, 0, 1, 1], [], []>} : vector<64x4xbf16>, vector<4x8xbf16>, vector<64x8xf32> -> vector<64x8xf32>
    %12 = arith.addf %5, %11 : vector<64x8xf32>
    %c0_13 = arith.constant 0 : index
    %c0_14 = arith.constant 0 : index
    %c1_15 = arith.constant 1 : index
    %c0_16 = arith.constant 0 : index
    %13 = vector.load %arg3[%c0_13, %c0_14, %c1_15, %c0_16] : memref<8x8x9x4xbf16, #tpu.memory_space<vmem>>, vector<1x8x8x4xbf16>
    %14 = vector.shape_cast %13 : vector<1x8x8x4xbf16> to vector<8x8x4xbf16>
    %15 = vector.shape_cast %14 : vector<8x8x4xbf16> to vector<64x4xbf16>
    %c2 = arith.constant 2 : index
    %c0_17 = arith.constant 0 : index
    %c0_18 = arith.constant 0 : index
    %16 = vector.load %arg4[%c2, %c0_17, %c0_18] : memref<16x4x8xbf16, #tpu.memory_space<vmem>>, vector<1x4x8xbf16>
    %17 = vector.shape_cast %16 : vector<1x4x8xbf16> to vector<4x8xbf16>
    %cst_19 = arith.constant dense<0.000000e+00> : vector<64x8xf32>
    %18 = tpu.matmul %15, %17, %cst_19 {dimension_numbers = #tpu.dot_dimension_numbers<[1], [0], [0], [1], [0, 0, 1, 1], [], []>} : vector<64x4xbf16>, vector<4x8xbf16>, vector<64x8xf32> -> vector<64x8xf32>
    %19 = arith.addf %12, %18 : vector<64x8xf32>
    %c1_20 = arith.constant 1 : index
    %c0_21 = arith.constant 0 : index
    %c1_22 = arith.constant 1 : index
    %c0_23 = arith.constant 0 : index
    %20 = vector.load %arg3[%c1_20, %c0_21, %c1_22, %c0_23] : memref<8x8x9x4xbf16, #tpu.memory_space<vmem>>, vector<1x8x8x4xbf16>
    %21 = vector.shape_cast %20 : vector<1x8x8x4xbf16> to vector<8x8x4xbf16>
    %22 = vector.shape_cast %21 : vector<8x8x4xbf16> to vector<64x4xbf16>
    %c3 = arith.constant 3 : index
    %c0_24 = arith.constant 0 : index
    %c0_25 = arith.constant 0 : index
    %23 = vector.load %arg4[%c3, %c0_24, %c0_25] : memref<16x4x8xbf16, #tpu.memory_space<vmem>>, vector<1x4x8xbf16>
    %24 = vector.shape_cast %23 : vector<1x4x8xbf16> to vector<4x8xbf16>
    %cst_26 = arith.constant dense<0.000000e+00> : vector<64x8xf32>
    %25 = tpu.matmul %22, %24, %cst_26 {dimension_numbers = #tpu.dot_dimension_numbers<[1], [0], [0], [1], [0, 0, 1, 1], [], []>} : vector<64x4xbf16>, vector<4x8xbf16>, vector<64x8xf32> -> vector<64x8xf32>
    %26 = arith.addf %19, %25 : vector<64x8xf32>
    %c2_27 = arith.constant 2 : index
    %c0_28 = arith.constant 0 : index
    %c0_29 = arith.constant 0 : index
    %c0_30 = arith.constant 0 : index
    %27 = vector.load %arg3[%c2_27, %c0_28, %c0_29, %c0_30] : memref<8x8x9x4xbf16, #tpu.memory_space<vmem>>, vector<1x8x8x4xbf16>
    %28 = vector.shape_cast %27 : vector<1x8x8x4xbf16> to vector<8x8x4xbf16>
    %29 = vector.shape_cast %28 : vector<8x8x4xbf16> to vector<64x4xbf16>
    %c4 = arith.constant 4 : index
    %c0_31 = arith.constant 0 : index
    %c0_32 = arith.constant 0 : index
    %30 = vector.load %arg4[%c4, %c0_31, %c0_32] : memref<16x4x8xbf16, #tpu.memory_space<vmem>>, vector<1x4x8xbf16>
    %31 = vector.shape_cast %30 : vector<1x4x8xbf16> to vector<4x8xbf16>
    %cst_33 = arith.constant dense<0.000000e+00> : vector<64x8xf32>
    %32 = tpu.matmul %29, %31, %cst_33 {dimension_numbers = #tpu.dot_dimension_numbers<[1], [0], [0], [1], [0, 0, 1, 1], [], []>} : vector<64x4xbf16>, vector<4x8xbf16>, vector<64x8xf32> -> vector<64x8xf32>
    %33 = arith.addf %26, %32 : vector<64x8xf32>
    %c3_34 = arith.constant 3 : index
    %c0_35 = arith.constant 0 : index
    %c0_36 = arith.constant 0 : index
    %c0_37 = arith.constant 0 : index
    %34 = vector.load %arg3[%c3_34, %c0_35, %c0_36, %c0_37] : memref<8x8x9x4xbf16, #tpu.memory_space<vmem>>, vector<1x8x8x4xbf16>
    %35 = vector.shape_cast %34 : vector<1x8x8x4xbf16> to vector<8x8x4xbf16>
    %36 = vector.shape_cast %35 : vector<8x8x4xbf16> to vector<64x4xbf16>
    %c5 = arith.constant 5 : index
    %c0_38 = arith.constant 0 : index
    %c0_39 = arith.constant 0 : index
    %37 = vector.load %arg4[%c5, %c0_38, %c0_39] : memref<16x4x8xbf16, #tpu.memory_space<vmem>>, vector<1x4x8xbf16>
    %38 = vector.shape_cast %37 : vector<1x4x8xbf16> to vector<4x8xbf16>
    %cst_40 = arith.constant dense<0.000000e+00> : vector<64x8xf32>
    %39 = tpu.matmul %36, %38, %cst_40 {dimension_numbers = #tpu.dot_dimension_numbers<[1], [0], [0], [1], [0, 0, 1, 1], [], []>} : vector<64x4xbf16>, vector<4x8xbf16>, vector<64x8xf32> -> vector<64x8xf32>
    %40 = arith.addf %33, %39 : vector<64x8xf32>
    %c2_41 = arith.constant 2 : index
    %c0_42 = arith.constant 0 : index
    %c1_43 = arith.constant 1 : index
    %c0_44 = arith.constant 0 : index
    %41 = vector.load %arg3[%c2_41, %c0_42, %c1_43, %c0_44] : memref<8x8x9x4xbf16, #tpu.memory_space<vmem>>, vector<1x8x8x4xbf16>
    %42 = vector.shape_cast %41 : vector<1x8x8x4xbf16> to vector<8x8x4xbf16>
    %43 = vector.shape_cast %42 : vector<8x8x4xbf16> to vector<64x4xbf16>
    %c6 = arith.constant 6 : index
    %c0_45 = arith.constant 0 : index
    %c0_46 = arith.constant 0 : index
    %44 = vector.load %arg4[%c6, %c0_45, %c0_46] : memref<16x4x8xbf16, #tpu.memory_space<vmem>>, vector<1x4x8xbf16>
    %45 = vector.shape_cast %44 : vector<1x4x8xbf16> to vector<4x8xbf16>
    %cst_47 = arith.constant dense<0.000000e+00> : vector<64x8xf32>
    %46 = tpu.matmul %43, %45, %cst_47 {dimension_numbers = #tpu.dot_dimension_numbers<[1], [0], [0], [1], [0, 0, 1, 1], [], []>} : vector<64x4xbf16>, vector<4x8xbf16>, vector<64x8xf32> -> vector<64x8xf32>
    %47 = arith.addf %40, %46 : vector<64x8xf32>
    %c3_48 = arith.constant 3 : index
    %c0_49 = arith.constant 0 : index
    %c1_50 = arith.constant 1 : index
    %c0_51 = arith.constant 0 : index
    %48 = vector.load %arg3[%c3_48, %c0_49, %c1_50, %c0_51] : memref<8x8x9x4xbf16, #tpu.memory_space<vmem>>, vector<1x8x8x4xbf16>
    %49 = vector.shape_cast %48 : vector<1x8x8x4xbf16> to vector<8x8x4xbf16>
    %50 = vector.shape_cast %49 : vector<8x8x4xbf16> to vector<64x4xbf16>
    %c7 = arith.constant 7 : index
    %c0_52 = arith.constant 0 : index
    %c0_53 = arith.constant 0 : index
    %51 = vector.load %arg4[%c7, %c0_52, %c0_53] : memref<16x4x8xbf16, #tpu.memory_space<vmem>>, vector<1x4x8xbf16>
    %52 = vector.shape_cast %51 : vector<1x4x8xbf16> to vector<4x8xbf16>
    %cst_54 = arith.constant dense<0.000000e+00> : vector<64x8xf32>
    %53 = tpu.matmul %50, %52, %cst_54 {dimension_numbers = #tpu.dot_dimension_numbers<[1], [0], [0], [1], [0, 0, 1, 1], [], []>} : vector<64x4xbf16>, vector<4x8xbf16>, vector<64x8xf32> -> vector<64x8xf32>
    %54 = arith.addf %47, %53 : vector<64x8xf32>
    %c4_55 = arith.constant 4 : index
    %c0_56 = arith.constant 0 : index
    %c0_57 = arith.constant 0 : index
    %c0_58 = arith.constant 0 : index
    %55 = vector.load %arg3[%c4_55, %c0_56, %c0_57, %c0_58] : memref<8x8x9x4xbf16, #tpu.memory_space<vmem>>, vector<1x8x8x4xbf16>
    %56 = vector.shape_cast %55 : vector<1x8x8x4xbf16> to vector<8x8x4xbf16>
    %57 = vector.shape_cast %56 : vector<8x8x4xbf16> to vector<64x4xbf16>
    %c8 = arith.constant 8 : index
    %c0_59 = arith.constant 0 : index
    %c0_60 = arith.constant 0 : index
    %58 = vector.load %arg4[%c8, %c0_59, %c0_60] : memref<16x4x8xbf16, #tpu.memory_space<vmem>>, vector<1x4x8xbf16>
    %59 = vector.shape_cast %58 : vector<1x4x8xbf16> to vector<4x8xbf16>
    %cst_61 = arith.constant dense<0.000000e+00> : vector<64x8xf32>
    %60 = tpu.matmul %57, %59, %cst_61 {dimension_numbers = #tpu.dot_dimension_numbers<[1], [0], [0], [1], [0, 0, 1, 1], [], []>} : vector<64x4xbf16>, vector<4x8xbf16>, vector<64x8xf32> -> vector<64x8xf32>
    %61 = arith.addf %54, %60 : vector<64x8xf32>
    %c5_62 = arith.constant 5 : index
    %c0_63 = arith.constant 0 : index
    %c0_64 = arith.constant 0 : index
    %c0_65 = arith.constant 0 : index
    %62 = vector.load %arg3[%c5_62, %c0_63, %c0_64, %c0_65] : memref<8x8x9x4xbf16, #tpu.memory_space<vmem>>, vector<1x8x8x4xbf16>
    %63 = vector.shape_cast %62 : vector<1x8x8x4xbf16> to vector<8x8x4xbf16>
    %64 = vector.shape_cast %63 : vector<8x8x4xbf16> to vector<64x4xbf16>
    %c9 = arith.constant 9 : index
    %c0_66 = arith.constant 0 : index
    %c0_67 = arith.constant 0 : index
    %65 = vector.load %arg4[%c9, %c0_66, %c0_67] : memref<16x4x8xbf16, #tpu.memory_space<vmem>>, vector<1x4x8xbf16>
    %66 = vector.shape_cast %65 : vector<1x4x8xbf16> to vector<4x8xbf16>
    %cst_68 = arith.constant dense<0.000000e+00> : vector<64x8xf32>
    %67 = tpu.matmul %64, %66, %cst_68 {dimension_numbers = #tpu.dot_dimension_numbers<[1], [0], [0], [1], [0, 0, 1, 1], [], []>} : vector<64x4xbf16>, vector<4x8xbf16>, vector<64x8xf32> -> vector<64x8xf32>
    %68 = arith.addf %61, %67 : vector<64x8xf32>
    %c4_69 = arith.constant 4 : index
    %c0_70 = arith.constant 0 : index
    %c1_71 = arith.constant 1 : index
    %c0_72 = arith.constant 0 : index
    %69 = vector.load %arg3[%c4_69, %c0_70, %c1_71, %c0_72] : memref<8x8x9x4xbf16, #tpu.memory_space<vmem>>, vector<1x8x8x4xbf16>
    %70 = vector.shape_cast %69 : vector<1x8x8x4xbf16> to vector<8x8x4xbf16>
    %71 = vector.shape_cast %70 : vector<8x8x4xbf16> to vector<64x4xbf16>
    %c10 = arith.constant 10 : index
    %c0_73 = arith.constant 0 : index
    %c0_74 = arith.constant 0 : index
    %72 = vector.load %arg4[%c10, %c0_73, %c0_74] : memref<16x4x8xbf16, #tpu.memory_space<vmem>>, vector<1x4x8xbf16>
    %73 = vector.shape_cast %72 : vector<1x4x8xbf16> to vector<4x8xbf16>
    %cst_75 = arith.constant dense<0.000000e+00> : vector<64x8xf32>
    %74 = tpu.matmul %71, %73, %cst_75 {dimension_numbers = #tpu.dot_dimension_numbers<[1], [0], [0], [1], [0, 0, 1, 1], [], []>} : vector<64x4xbf16>, vector<4x8xbf16>, vector<64x8xf32> -> vector<64x8xf32>
    %75 = arith.addf %68, %74 : vector<64x8xf32>
    %c5_76 = arith.constant 5 : index
    %c0_77 = arith.constant 0 : index
    %c1_78 = arith.constant 1 : index
    %c0_79 = arith.constant 0 : index
    %76 = vector.load %arg3[%c5_76, %c0_77, %c1_78, %c0_79] : memref<8x8x9x4xbf16, #tpu.memory_space<vmem>>, vector<1x8x8x4xbf16>
    %77 = vector.shape_cast %76 : vector<1x8x8x4xbf16> to vector<8x8x4xbf16>
    %78 = vector.shape_cast %77 : vector<8x8x4xbf16> to vector<64x4xbf16>
    %c11 = arith.constant 11 : index
    %c0_80 = arith.constant 0 : index
    %c0_81 = arith.constant 0 : index
    %79 = vector.load %arg4[%c11, %c0_80, %c0_81] : memref<16x4x8xbf16, #tpu.memory_space<vmem>>, vector<1x4x8xbf16>
    %80 = vector.shape_cast %79 : vector<1x4x8xbf16> to vector<4x8xbf16>
    %cst_82 = arith.constant dense<0.000000e+00> : vector<64x8xf32>
    %81 = tpu.matmul %78, %80, %cst_82 {dimension_numbers = #tpu.dot_dimension_numbers<[1], [0], [0], [1], [0, 0, 1, 1], [], []>} : vector<64x4xbf16>, vector<4x8xbf16>, vector<64x8xf32> -> vector<64x8xf32>
    %82 = arith.addf %75, %81 : vector<64x8xf32>
    %c6_83 = arith.constant 6 : index
    %c0_84 = arith.constant 0 : index
    %c0_85 = arith.constant 0 : index
    %c0_86 = arith.constant 0 : index
    %83 = vector.load %arg3[%c6_83, %c0_84, %c0_85, %c0_86] : memref<8x8x9x4xbf16, #tpu.memory_space<vmem>>, vector<1x8x8x4xbf16>
    %84 = vector.shape_cast %83 : vector<1x8x8x4xbf16> to vector<8x8x4xbf16>
    %85 = vector.shape_cast %84 : vector<8x8x4xbf16> to vector<64x4xbf16>
    %c12 = arith.constant 12 : index
    %c0_87 = arith.constant 0 : index
    %c0_88 = arith.constant 0 : index
    %86 = vector.load %arg4[%c12, %c0_87, %c0_88] : memref<16x4x8xbf16, #tpu.memory_space<vmem>>, vector<1x4x8xbf16>
    %87 = vector.shape_cast %86 : vector<1x4x8xbf16> to vector<4x8xbf16>
    %cst_89 = arith.constant dense<0.000000e+00> : vector<64x8xf32>
    %88 = tpu.matmul %85, %87, %cst_89 {dimension_numbers = #tpu.dot_dimension_numbers<[1], [0], [0], [1], [0, 0, 1, 1], [], []>} : vector<64x4xbf16>, vector<4x8xbf16>, vector<64x8xf32> -> vector<64x8xf32>
    %89 = arith.addf %82, %88 : vector<64x8xf32>
    %c7_90 = arith.constant 7 : index
    %c0_91 = arith.constant 0 : index
    %c0_92 = arith.constant 0 : index
    %c0_93 = arith.constant 0 : index
    %90 = vector.load %arg3[%c7_90, %c0_91, %c0_92, %c0_93] : memref<8x8x9x4xbf16, #tpu.memory_space<vmem>>, vector<1x8x8x4xbf16>
    %91 = vector.shape_cast %90 : vector<1x8x8x4xbf16> to vector<8x8x4xbf16>
    %92 = vector.shape_cast %91 : vector<8x8x4xbf16> to vector<64x4xbf16>
    %c13 = arith.constant 13 : index
    %c0_94 = arith.constant 0 : index
    %c0_95 = arith.constant 0 : index
    %93 = vector.load %arg4[%c13, %c0_94, %c0_95] : memref<16x4x8xbf16, #tpu.memory_space<vmem>>, vector<1x4x8xbf16>
    %94 = vector.shape_cast %93 : vector<1x4x8xbf16> to vector<4x8xbf16>
    %cst_96 = arith.constant dense<0.000000e+00> : vector<64x8xf32>
    %95 = tpu.matmul %92, %94, %cst_96 {dimension_numbers = #tpu.dot_dimension_numbers<[1], [0], [0], [1], [0, 0, 1, 1], [], []>} : vector<64x4xbf16>, vector<4x8xbf16>, vector<64x8xf32> -> vector<64x8xf32>
    %96 = arith.addf %89, %95 : vector<64x8xf32>
    %c6_97 = arith.constant 6 : index
    %c0_98 = arith.constant 0 : index
    %c1_99 = arith.constant 1 : index
    %c0_100 = arith.constant 0 : index
    %97 = vector.load %arg3[%c6_97, %c0_98, %c1_99, %c0_100] : memref<8x8x9x4xbf16, #tpu.memory_space<vmem>>, vector<1x8x8x4xbf16>
    %98 = vector.shape_cast %97 : vector<1x8x8x4xbf16> to vector<8x8x4xbf16>
    %99 = vector.shape_cast %98 : vector<8x8x4xbf16> to vector<64x4xbf16>
    %c14 = arith.constant 14 : index
    %c0_101 = arith.constant 0 : index
    %c0_102 = arith.constant 0 : index
    %100 = vector.load %arg4[%c14, %c0_101, %c0_102] : memref<16x4x8xbf16, #tpu.memory_space<vmem>>, vector<1x4x8xbf16>
    %101 = vector.shape_cast %100 : vector<1x4x8xbf16> to vector<4x8xbf16>
    %cst_103 = arith.constant dense<0.000000e+00> : vector<64x8xf32>
    %102 = tpu.matmul %99, %101, %cst_103 {dimension_numbers = #tpu.dot_dimension_numbers<[1], [0], [0], [1], [0, 0, 1, 1], [], []>} : vector<64x4xbf16>, vector<4x8xbf16>, vector<64x8xf32> -> vector<64x8xf32>
    %103 = arith.addf %96, %102 : vector<64x8xf32>
    %c7_104 = arith.constant 7 : index
    %c0_105 = arith.constant 0 : index
    %c1_106 = arith.constant 1 : index
    %c0_107 = arith.constant 0 : index
    %104 = vector.load %arg3[%c7_104, %c0_105, %c1_106, %c0_107] : memref<8x8x9x4xbf16, #tpu.memory_space<vmem>>, vector<1x8x8x4xbf16>
    %105 = vector.shape_cast %104 : vector<1x8x8x4xbf16> to vector<8x8x4xbf16>
    %106 = vector.shape_cast %105 : vector<8x8x4xbf16> to vector<64x4xbf16>
    %c15 = arith.constant 15 : index
    %c0_108 = arith.constant 0 : index
    %c0_109 = arith.constant 0 : index
    %107 = vector.load %arg4[%c15, %c0_108, %c0_109] : memref<16x4x8xbf16, #tpu.memory_space<vmem>>, vector<1x4x8xbf16>
    %108 = vector.shape_cast %107 : vector<1x4x8xbf16> to vector<4x8xbf16>
    %cst_110 = arith.constant dense<0.000000e+00> : vector<64x8xf32>
    %109 = tpu.matmul %106, %108, %cst_110 {dimension_numbers = #tpu.dot_dimension_numbers<[1], [0], [0], [1], [0, 0, 1, 1], [], []>} : vector<64x4xbf16>, vector<4x8xbf16>, vector<64x8xf32> -> vector<64x8xf32>
    %110 = arith.addf %103, %109 : vector<64x8xf32>
    %c0_111 = arith.constant 0 : index
    %c0_112 = arith.constant 0 : index
    %111 = vector.load %arg5[%c0_111, %c0_112] : memref<1x8xf32, #tpu.memory_space<vmem>>, vector<1x8xf32>
    %112 = vector.broadcast %111 : vector<1x8xf32> to vector<64x8xf32>
    %113 = arith.addf %110, %112 : vector<64x8xf32>
    %c0_113 = arith.constant 0 : index
    %c0_114 = arith.constant 0 : index
    %c0_115 = arith.constant 0 : index
    %114 = vector.load %arg6[%c0_113, %c0_114, %c0_115] : memref<1x64x8xf32, #tpu.memory_space<vmem>>, vector<1x64x8xf32>
    %115 = vector.shape_cast %114 : vector<1x64x8xf32> to vector<64x8xf32>
    %116 = vector.shape_cast %113 : vector<64x8xf32> to vector<1x64x8xf32>
    tpu.vector_store %arg6[%c0_113, %c0_114, %c0_115], %116 {strides = array<i32>} : memref<1x64x8xf32, #tpu.memory_space<vmem>>, vector<1x64x8xf32>,
    return
  }
  func.func @transform_0(%arg0: i32, %arg1: i32, %arg2: i32) -> (i32, i32, i32, i32) {
    %c0_i32 = arith.constant 0 : i32
    %c0_i32_0 = arith.constant 0 : i32
    %c0_i32_1 = arith.constant 0 : i32
    return %arg0, %arg1, %c0_i32, %c0_i32_0 : i32, i32, i32, i32
  }
  func.func @transform_1(%arg0: i32, %arg1: i32, %arg2: i32) -> (i32, i32, i32) {
    %c0_i32 = arith.constant 0 : i32
    %c0_i32_0 = arith.constant 0 : i32
    %c0_i32_1 = arith.constant 0 : i32
    return %c0_i32, %c0_i32_0, %arg2 : i32, i32, i32
  }
  func.func @transform_2(%arg0: i32, %arg1: i32, %arg2: i32) -> (i32, i32) {
    %c0_i32 = arith.constant 0 : i32
    %c0_i32_0 = arith.constant 0 : i32
    return %c0_i32, %arg2 : i32, i32
  }
  func.func @transform_3(%arg0: i32, %arg1: i32, %arg2: i32) -> (i32, i32, i32) {
    %c0_i32 = arith.constant 0 : i32
    return %arg0, %arg1, %arg2 : i32, i32, i32
  }
}

</mosaic_0001>

<llo_original>
// kernel: dc_down_block2d_pallas.1
$region0: #{dc_down_block2d_pallas.1}
  #allocation0 [shape = 'u32[]', space=smem, size = 0x4, offset = 0x4, fixed_abs, tag = 'smem constant byte address 0x4 - core index']
  #allocation1 [shape = 'u32[144,128]{1,0:T(1,128)}', space=vmem, size = 0x12000, scoped, tag = 'internal scratch']
  %s0 = inlined_call_operand.vmem [shape: bf16[16,8,9,4], index: 0, kind: input, shape index: {}]
  %s1 = inlined_call_operand.vmem [shape: bf16[16,4,8], index: 1, kind: input, shape index: {}]
  %s2 = inlined_call_operand.vmem [shape: f32[1,8], index: 2, kind: input, shape index: {}]
  %s3 = inlined_call_operand.vmem [shape: f32[2,64,8], index: 3, kind: output, shape index: {}]
  %s4 = sld [smem:[#allocation0]]
  $region45: #{dc_down_block2d_pallas.1} parent=0
    _
  %s6 = ssub.s32 1, %s4
  %s7 = scalar_select 0, %s6, %s4
  loop: start=0, step=1, limit=4
  $region2: #{dc_down_block2d_pallas.1} parent=0 // loop_pre_header
    _
  $region3: #{dc_down_block2d_pallas.1} parent=0 // loop_header
    %s9 = sphi 0, %s13
    %p10 = scmp.ge.s32.totalorder %s9, 4
    %s16 = sphi 0, %s35
    %s17 = sphi 0, %s31
    %s18 = sphi 0, %s27
    %s19 = sphi 0, %s16
    %s20 = sphi 0, %s17
    %s21 = sphi 0, %s18
    %s22 = sphi 0, %s19
    %s23 = sphi 0, %s20
    %s24 = sphi 0, %s21
    %s40 = sphi 0, %s42
    %s43 = sphi 0, %s40
    %s44 = sphi 0, %s43
    %s60 = sphi 0, %s44
    %s66 = sphi 0, %s68
    %s69 = sphi 0, %s66
    %s70 = sphi 0, %s69
    %s86 = sphi 0, %s70
    %s92 = sphi 0, %s94
    %s95 = sphi 0, %s92
    %s96 = sphi 0, %s95
    %s112 = sphi 0, %s96
    %s122 = sphi 0, %s124
    %s125 = sphi 0, %s122
    %s126 = sphi 0, %s125
    %s142 = sphi 0, %s126
  $region4: #{dc_down_block2d_pallas.1} parent=0 // loop_header_branch
    %12 = sbr.rel (%p10) target = $region8
  $region5: #{dc_down_block2d_pallas.1} parent=0 // loop_body
    %s14 = ssub.s32 %s9, 1
    %s15 = ssub.s32 %s9, 2
    %s25 = sadd.s32 1, %s18
    %p26 = scmp.ge.s32.totalorder %s25, 1
    %s27 = scalar_select %p26, 0, %s25
    %s28 = sadd.s32 1, %s17
    %s29 = scalar_select %p26, %s28, %s17
    %p30 = scmp.ge.s32.totalorder %s29, 1
    %s31 = scalar_select %p30, 0, %s29
    %s32 = sadd.s32 1, %s16
    %s33 = scalar_select %p30, %s32, %s16
    %p34 = scmp.ge.s32.totalorder %s33, 2
    %s35 = scalar_select %p34, 0, %s33
    %s36 = ssub.s32 %s16, %s35
    %s37 = ssub.s32 %s17, %s31
    %s38 = sor.u32 %s36, %s37
    %p39 = scmp.eq.s32.totalorder %s38, 0
    %s41 = sadd.s32 %s40, 1
    %s42 = scalar_select %p39, %s40, %s41
    %p45 = pneg %p39
    %p46 = scmp.eq.s32.totalorder %s9, 1
    %p47 = por %p45, %p46
    %p48 = scmp.ne.s32.totalorder %s40, %s43
    %p49 = scmp.eq.s32.totalorder %s9, 0
    %p50 = por %p48, %p49
    %p51 = scmp.ne.s32.totalorder %s40, %s43
    %p52 = scmp.eq.s32.totalorder %s14, 1
    %p53 = por %p51, %p52
    %p54 = scmp.ne.s32.totalorder %s43, %s44
    %p55 = scmp.eq.s32.totalorder %s14, 0
    %p56 = por %p54, %p55
    %p57 = scmp.ne.s32.totalorder %s43, %s44
    %p58 = scmp.eq.s32.totalorder %s15, 1
    %p59 = por %p57, %p58
    %p61 = scmp.ne.s32.totalorder %s44, %s60
    %p62 = scmp.eq.s32.totalorder %s15, 0
    %p63 = por %p61, %p62
    %s64 = ssub.s32 %s18, %s27
    %p65 = scmp.eq.s32.totalorder %s64, 0
    %s67 = sadd.s32 %s66, 1
    %s68 = scalar_select %p65, %s66, %s67
    %p71 = pneg %p65
    %p72 = scmp.eq.s32.totalorder %s9, 1
    %p73 = por %p71, %p72
    %p74 = scmp.ne.s32.totalorder %s66, %s69
    %p75 = scmp.eq.s32.totalorder %s9, 0
    %p76 = por %p74, %p75
    %p77 = scmp.ne.s32.totalorder %s66, %s69
    %p78 = scmp.eq.s32.totalorder %s14, 1
    %p79 = por %p77, %p78
    %p80 = scmp.ne.s32.totalorder %s69, %s70
    %p81 = scmp.eq.s32.totalorder %s14, 0
    %p82 = por %p80, %p81
    %p83 = scmp.ne.s32.totalorder %s69, %s70
    %p84 = scmp.eq.s32.totalorder %s15, 1
    %p85 = por %p83, %p84
    %p87 = scmp.ne.s32.totalorder %s70, %s86
    %p88 = scmp.eq.s32.totalorder %s15, 0
    %p89 = por %p87, %p88
    %s90 = ssub.s32 %s18, %s27
    %p91 = scmp.eq.s32.totalorder %s90, 0
    %s93 = sadd.s32 %s92, 1
    %s94 = scalar_select %p91, %s92, %s93
    %p97 = pneg %p91
    %p98 = scmp.eq.s32.totalorder %s9, 1
    %p99 = por %p97, %p98
    %p100 = scmp.ne.s32.totalorder %s92, %s95
    %p101 = scmp.eq.s32.totalorder %s9, 0
    %p102 = por %p100, %p101
    %p103 = scmp.ne.s32.totalorder %s92, %s95
    %p104 = scmp.eq.s32.totalorder %s14, 1
    %p105 = por %p103, %p104
    %p106 = scmp.ne.s32.totalorder %s95, %s96
    %p107 = scmp.eq.s32.totalorder %s14, 0
    %p108 = por %p106, %p107
    %p109 = scmp.ne.s32.totalorder %s95, %s96
    %p110 = scmp.eq.s32.totalorder %s15, 1
    %p111 = por %p109, %p110
    %p113 = scmp.ne.s32.totalorder %s96, %s112
    %p114 = scmp.eq.s32.totalorder %s15, 0
    %p115 = por %p113, %p114
    %s116 = ssub.s32 %s16, %s35
    %s117 = ssub.s32 %s17, %s31
    %s118 = sor.u32 %s116, %s117
    %s119 = ssub.s32 %s18, %s27
    %s120 = sor.u32 %s118, %s119
    %p121 = scmp.eq.s32.totalorder %s120, 0
    %s123 = sadd.s32 %s122, 1
    %s124 = scalar_select %p121, %s122, %s123
    %p127 = pneg %p121
    %p128 = scmp.eq.s32.totalorder %s9, 1
    %p129 = por %p127, %p128
    %p130 = scmp.ne.s32.totalorder %s122, %s125
    %p131 = scmp.eq.s32.totalorder %s9, 0
    %p132 = por %p130, %p131
    %p133 = scmp.ne.s32.totalorder %s122, %s125
    %p134 = scmp.eq.s32.totalorder %s14, 1
    %p135 = por %p133, %p134
    %p136 = scmp.ne.s32.totalorder %s125, %s126
    %p137 = scmp.eq.s32.totalorder %s14, 0
    %p138 = por %p136, %p137
    %p139 = scmp.ne.s32.totalorder %s125, %s126
    %p140 = scmp.eq.s32.totalorder %s15, 1
    %p141 = por %p139, %p140
    %p143 = scmp.ne.s32.totalorder %s126, %s142
    %p144 = scmp.eq.s32.totalorder %s15, 0
    %p145 = por %p143, %p144
    %p146 = scmp.le.s32.totalorder 1, %s9
    %p147 = scmp.lt.s32.totalorder %s9, 3
    %p148 = pnand %p146, %p147
    %p149 = pneg %p148
    // Predicated region
    $region9: #{dc_down_block2d_pallas.1} parent=5 // pred_check
      _
    $region10: #{dc_down_block2d_pallas.1} parent=5 // pred_check_branch
      %151 = sbr.rel (%p148) target = $region12
    $region11: #{dc_down_block2d_pallas.1} parent=5 // pred_region
      %s152 = ssub.s32 %s9, 1
      // Predicated region
      $region13: #{dc_down_block2d_pallas.1} parent=11 // pred_check
        %p153 = pneg %p82
      $region14: #{dc_down_block2d_pallas.1} parent=11 // pred_check_branch
        %155 = sbr.rel (%p153) target = $region16
      $region15: #{dc_down_block2d_pallas.1} parent=11 // pred_region
        %p156 = scmp.lt.s32.totalorder %s21, 0
        %s157 = scalar_select %p156, %s21, 0
        %s158 = smul.addr %s157, 2
        %s159 = scalar_lea.vmem %s1, %s158
      $region16: #{dc_down_block2d_pallas.1} parent=11 // pred_fallthru
        _
      // Predicated region
      $region17: #{dc_down_block2d_pallas.1} parent=11 // pred_check
        %p160 = pneg %p108
      $region18: #{dc_down_block2d_pallas.1} parent=11 // pred_check_branch
        %162 = sbr.rel (%p160) target = $region20
      $region19: #{dc_down_block2d_pallas.1} parent=11 // pred_region
        %p163 = scmp.lt.s32.totalorder %s21, 0
        %s164 = scalar_select %p163, %s21, 0
        %s165 = scalar_lea.vmem %s2, %s164
      $region20: #{dc_down_block2d_pallas.1} parent=11 // pred_fallthru
        _
    $region12: #{dc_down_block2d_pallas.1} parent=5 // pred_fallthru
      _
    %p166 = scmp.lt.s32.totalorder %s9, 2
    // Predicated region
    $region21: #{dc_down_block2d_pallas.1} parent=5 // pred_check
      %p167 = pneg %p166
    $region22: #{dc_down_block2d_pallas.1} parent=5 // pred_check_branch
      %169 = sbr.rel (%p167) target = $region24
    $region23: #{dc_down_block2d_pallas.1} parent=5 // pred_region
      // Predicated region
      $region25: #{dc_down_block2d_pallas.1} parent=23 // pred_check
        %p170 = pneg %p50
      $region26: #{dc_down_block2d_pallas.1} parent=23 // pred_check_branch
        %172 = sbr.rel (%p170) target = $region28
      $region27: #{dc_down_block2d_pallas.1} parent=23 // pred_region
        %s173 = smul.u32 8, %s16
        %s174 = smul.u32 8, %s17
        %p175 = scmp.lt.s32.totalorder %s173, 15
        %s176 = scalar_select %p175, %s173, 15
        %p177 = scmp.lt.s32.totalorder %s174, 7
        %s178 = scalar_select %p177, %s174, 7
        %s179 = smul.addr %s178, 2
        %s180 = smul.addr %s176, 16
        %s181 = sadd.s32 %s179, %s180
        %s182 = smul.addr %s181, 4
        %s183 = scalar_lea.vmem %s0, %s182
        %s184 = smul.u32 8, %s16
        %s185 = smul.u32 8, %s17
      $region28: #{dc_down_block2d_pallas.1} parent=23 // pred_fallthru
        _
    $region24: #{dc_down_block2d_pallas.1} parent=5 // pred_fallthru
      _
    %p186 = scmp.le.s32.totalorder 1, %s9
    %p187 = scmp.lt.s32.totalorder %s9, 3
    %p188 = pnand %p186, %p187
    %p189 = pneg %p188
    // Predicated region
    $region29: #{dc_down_block2d_pallas.1} parent=5 // pred_check
      _
    $region30: #{dc_down_block2d_pallas.1} parent=5 // pred_check_branch
      %191 = sbr.rel (%p188) target = $region32
    $region31: #{dc_down_block2d_pallas.1} parent=5 // pred_region
      %s192 = ssub.s32 %s9, 1
      %s193 = smul.u32 8, %s19
      %s194 = smul.u32 8, %s20
      %p195 = scmp.lt.s32.totalorder %s193, 15
      %s196 = scalar_select %p195, %s193, 15
      %p197 = scmp.lt.s32.totalorder %s194, 7
      %s198 = scalar_select %p197, %s194, 7
      %s199 = smul.addr %s198, 2
      %s200 = smul.addr %s196, 16
      %s201 = sadd.s32 %s199, %s200
      %s202 = smul.addr %s201, 4
      %s203 = scalar_lea.vmem %s0, %s202
      %p204 = pneg %p56
      %p205 = pneg %p53
      %p206 = scmp.lt.s32.totalorder %s21, 0
      %s207 = scalar_select %p206, %s21, 0
      %s208 = smul.addr %s207, 2
      %s209 = scalar_lea.vmem %s1, %s208
      %p210 = pneg %p82
      %p211 = pneg %p79
      %p212 = scmp.lt.s32.totalorder %s21, 0
      %s213 = scalar_select %p212, %s21, 0
      %s214 = scalar_lea.vmem %s2, %s213
      %p215 = pneg %p108
      %p216 = pneg %p105
      %p217 = pneg %p138
      %p218 = pneg %p135
      %s219 = smul.u32 8, %s20
      %p220 = scmp.lt.s32.totalorder %s19, 1
      %s221 = scalar_select %p220, %s19, 1
      %p222 = scmp.lt.s32.totalorder %s219, 7
      %s223 = scalar_select %p222, %s219, 7
      %p224 = scmp.lt.s32.totalorder %s21, 0
      %s225 = scalar_select %p224, %s21, 0
      %s226 = sadd.s32 %s225, %s223
      %s227 = smul.addr %s221, 8
      %s228 = sadd.s32 %s226, %s227
      %s229 = smul.addr %s228, 8
      %s230 = scalar_lea.vmem %s3, %s229
      %s231 = smul.u32 8, %s19
      %s232 = smul.u32 8, %s20
      %p233 = scmp.lt.s32.totalorder %s231, 15
      %s234 = scalar_select %p233, %s231, 15
      %p235 = scmp.lt.s32.totalorder %s232, 7
      %s236 = scalar_select %p235, %s232, 7
      %s237 = smul.addr %s236, 2
      %s238 = smul.addr %s234, 16
      %s239 = sadd.s32 %s237, %s238
      %s240 = smul.addr %s239, 4
      %s241 = scalar_lea.vmem %s0, %s240
      %s242 = smul.u32 8, %s19
      %s243 = smul.u32 8, %s20
      %p244 = scmp.lt.s32.totalorder %s21, 0
      %s245 = scalar_select %p244, %s21, 0
      %s246 = smul.addr %s245, 2
      %s247 = scalar_lea.vmem %s1, %s246
      %p248 = scmp.lt.s32.totalorder %s21, 0
      %s249 = scalar_select %p248, %s21, 0
      %s250 = scalar_lea.vmem %s2, %s249
      %s251 = smul.u32 8, %s20
      %p252 = scmp.lt.s32.totalorder %s19, 1
      %s253 = scalar_select %p252, %s19, 1
      %p254 = scmp.lt.s32.totalorder %s251, 7
      %s255 = scalar_select %p254, %s251, 7
      %p256 = scmp.lt.s32.totalorder %s21, 0
      %s257 = scalar_select %p256, %s21, 0
      %s258 = sadd.s32 %s257, %s255
      %s259 = smul.addr %s253, 8
      %s260 = sadd.s32 %s258, %s259
      %s261 = smul.addr %s260, 8
      %s262 = scalar_lea.vmem %s3, %s261
      %s263 = smul.u32 8, %s20
      %v265 = vld [vmem:[%s241] sm:$0xf]
      %v266 = vld [vmem:[%s241 + $0x8] sm:$0xf]
      %v267 = vld [vmem:[%s241 + $0x10] sm:$0xf]
      %v268 = vld [vmem:[%s241 + $0x18] sm:$0xf]
      %v269 = vld [vmem:[%s241 + $0x20] sm:$0xf]
      %v270 = vld [vmem:[%s241 + $0x28] sm:$0xf]
      %v271 = vld [vmem:[%s241 + $0x30] sm:$0xf]
      %v272 = vld [vmem:[%s241 + $0x38] sm:$0xf]
      %v273 = vld [vmem:[%s247] sm:$0x3]
      %s274 = scalar_lea.vmem %s241, 64
      %v275 = vld [vmem:[%s274] sm:$0xf]
      %v276 = vld [vmem:[%s274 + $0x8] sm:$0xf]
      %v277 = vld [vmem:[%s274 + $0x10] sm:$0xf]
      %v278 = vld [vmem:[%s274 + $0x18] sm:$0xf]
      %v279 = vld [vmem:[%s274 + $0x20] sm:$0xf]
      %v280 = vld [vmem:[%s274 + $0x28] sm:$0xf]
      %v281 = vld [vmem:[%s274 + $0x30] sm:$0xf]
      %v282 = vld [vmem:[%s274 + $0x38] sm:$0xf]
      %s283 = scalar_lea.vmem %s247, 2
      %v284 = vld [vmem:[%s283] sm:$0x3]
      %v293 = vunpack.c.l.b16 %v275
      %v294 = vunpack.c.l.b16 %v276
      %v295 = vunpack.c.l.b16 %v277
      %v296 = vunpack.c.l.b16 %v278
      %v297 = vunpack.c.l.b16 %v279
      %v298 = vunpack.c.l.b16 %v280
      %v299 = vunpack.c.l.b16 %v281
      %v300 = vunpack.c.l.b16 %v282
      %v301 = vpack.c.b16 %v294, %v293
      %v302 = vpack.c.b16 %v296, %v295
      %v303 = vpack.c.b16 %v298, %v297
      %v304 = vpack.c.b16 %v300, %v299
      %vm305 = vcmask 31744
      %v307 = vsel %vm305, %v301, 0
      %v310 = vsel %vm305, %v302, 0
      %v313 = vsel %vm305, %v303, 0
      %v316 = vsel %vm305, %v304, 0
      %vm318 = vcmask 1041408
      %v320 = vsel %vm318, %v284, 0
      %322 = vmatprep.subr.bf16.mxu0 0
      %323 = vmatpush1.bf16.msra.mxu0 0
      %324 = vmatprep.subr.bf16.mxu0 0
      %325 = vmatpush1.bf16.msra.mxu0 0
      %326 = vmatprep.subr.bf16.mxu0 0
      %327 = vmatpush1.bf16.msra.mxu0 0
      %328 = vmatprep.subr.bf16.mxu0 0
      %329 = vmatpush1.bf16.msra.mxu0 0
      %330 = vmatprep.subr.bf16.mxu0 0
      %331 = vmatpush1.bf16.msra.mxu0 0
      %332 = vmatprep.subr.bf16.mxu0 0
      %333 = vmatpush1.bf16.msra.mxu0 0
      %334 = vmatprep.subr.bf16.mxu0 0
      %335 = vmatpush1.bf16.msra.mxu0 0
      %336 = vmatprep.subr.bf16.mxu0 0
      %337 = vmatpush1.bf16.msra.mxu0 %v320
      %338 = vmatprep.subr.bf16.mxu0 0
      %339 = vmatpush2.bf16.msra.mxu0 0
      %340 = vmatprep.subr.bf16.mxu0 0
      %341 = vmatpush2.bf16.msra.mxu0 0
      %342 = vmatprep.subr.bf16.mxu0 0
      %343 = vmatpush2.bf16.msra.mxu0 0
      %344 = vmatprep.subr.bf16.mxu0 0
      %345 = vmatpush2.bf16.msra.mxu0 0
      %346 = vmatprep.subr.bf16.mxu0 0
      %347 = vmatpush2.bf16.msra.mxu0 0
      %348 = vmatprep.subr.bf16.mxu0 0
      %349 = vmatpush2.bf16.msra.mxu0 0
      %350 = vmatprep.subr.bf16.mxu0 0
      %351 = vmatpush2.bf16.msra.mxu0 0
      %352 = vmatprep.subr.bf16.mxu0 0
      %353 = vmatpush2.bf16.msra.mxu0 0
      %354 = vmatprep.mubr.bf16.mxu0 0
      %355 = vmatmul.mubr.bf16.gmra.mxu0 %v307
      %v356 = vpop.f32.mrf.mxu0
      %v357 = vadd.f32 0.0, %v356
      %v358 = vpop.f32.mrf.mxu0
      %v359 = vpop.f32.mrf.mxu0
      %v360 = vadd.f32 0.0, %v359
      %v361 = vpop.f32.mrf.mxu0
      %362 = vmatprep.mubr.bf16.mxu0 0
      %363 = vmatmul.mubr.bf16.gmra.mxu0 %v310
      %v364 = vpop.f32.mrf.mxu0
      %v365 = vadd.f32 0.0, %v364
      %v366 = vpop.f32.mrf.mxu0
      %v367 = vpop.f32.mrf.mxu0
      %v368 = vadd.f32 0.0, %v367
      %v369 = vpop.f32.mrf.mxu0
      %370 = vmatprep.mubr.bf16.mxu0 0
      %371 = vmatmul.mubr.bf16.gmra.mxu0 %v313
      %v372 = vpop.f32.mrf.mxu0
      %v373 = vadd.f32 0.0, %v372
      %v374 = vpop.f32.mrf.mxu0
      %v375 = vpop.f32.mrf.mxu0
      %v376 = vadd.f32 0.0, %v375
      %v377 = vpop.f32.mrf.mxu0
      %378 = vmatprep.mubr.bf16.mxu0 0
      %379 = vmatmul.mubr.bf16.gmra.mxu0 %v316
      %v380 = vpop.f32.mrf.mxu0
      %v381 = vadd.f32 0.0, %v380
      %v382 = vpop.f32.mrf.mxu0
      %v383 = vpop.f32.mrf.mxu0
      %v384 = vadd.f32 0.0, %v383
      %v385 = vpop.f32.mrf.mxu0
      %386 = vdwg.mxu0
      %v395 = vunpack.c.l.b16 %v265
      %v396 = vunpack.c.l.b16 %v266
      %v397 = vunpack.c.l.b16 %v267
      %v398 = vunpack.c.l.b16 %v268
      %v399 = vunpack.c.l.b16 %v269
      %v400 = vunpack.c.l.b16 %v270
      %v401 = vunpack.c.l.b16 %v271
      %v402 = vunpack.c.l.b16 %v272
      %v403 = vpack.c.b16 %v396, %v395
      %v404 = vpack.c.b16 %v398, %v397
      %v405 = vpack.c.b16 %v400, %v399
      %v406 = vpack.c.b16 %v402, %v401
      %v408 = vsel %vm305, %v403, 0
      %v411 = vsel %vm305, %v404, 0
      %v414 = vsel %vm305, %v405, 0
      %v417 = vsel %vm305, %v406, 0
      %v420 = vsel %vm318, %v273, 0
      %422 = vmatprep.subr.bf16.mxu0 0
      %423 = vmatpush1.bf16.msra.mxu0 0
      %424 = vmatprep.subr.bf16.mxu0 0
      %425 = vmatpush1.bf16.msra.mxu0 0
      %426 = vmatprep.subr.bf16.mxu0 0
      %427 = vmatpush1.bf16.msra.mxu0 0
      %428 = vmatprep.subr.bf16.mxu0 0
      %429 = vmatpush1.bf16.msra.mxu0 0
      %430 = vmatprep.subr.bf16.mxu0 0
      %431 = vmatpush1.bf16.msra.mxu0 0
      %432 = vmatprep.subr.bf16.mxu0 0
      %433 = vmatpush1.bf16.msra.mxu0 0
      %434 = vmatprep.subr.bf16.mxu0 0
      %435 = vmatpush1.bf16.msra.mxu0 0
      %436 = vmatprep.subr.bf16.mxu0 0
      %437 = vmatpush1.bf16.msra.mxu0 %v420
      %438 = vmatprep.subr.bf16.mxu0 0
      %439 = vmatpush2.bf16.msra.mxu0 0
      %440 = vmatprep.subr.bf16.mxu0 0
      %441 = vmatpush2.bf16.msra.mxu0 0
      %442 = vmatprep.subr.bf16.mxu0 0
      %443 = vmatpush2.bf16.msra.mxu0 0
      %444 = vmatprep.subr.bf16.mxu0 0
      %445 = vmatpush2.bf16.msra.mxu0 0
      %446 = vmatprep.subr.bf16.mxu0 0
      %447 = vmatpush2.bf16.msra.mxu0 0
      %448 = vmatprep.subr.bf16.mxu0 0
      %449 = vmatpush2.bf16.msra.mxu0 0
      %450 = vmatprep.subr.bf16.mxu0 0
      %451 = vmatpush2.bf16.msra.mxu0 0
      %452 = vmatprep.subr.bf16.mxu0 0
      %453 = vmatpush2.bf16.msra.mxu0 0
      %454 = vmatprep.mubr.bf16.mxu0 0
      %455 = vmatmul.mubr.bf16.gmra.mxu0 %v408
      %v456 = vpop.f32.mrf.mxu0
      %v457 = vadd.f32 %v357, %v456
      %v458 = vpop.f32.mrf.mxu0
      %v459 = vpop.f32.mrf.mxu0
      %v460 = vadd.f32 %v360, %v459
      %v461 = vpop.f32.mrf.mxu0
      %462 = vmatprep.mubr.bf16.mxu0 0
      %463 = vmatmul.mubr.bf16.gmra.mxu0 %v411
      %v464 = vpop.f32.mrf.mxu0
      %v465 = vadd.f32 %v365, %v464
      %v466 = vpop.f32.mrf.mxu0
      %v467 = vpop.f32.mrf.mxu0
      %v468 = vadd.f32 %v368, %v467
      %v469 = vpop.f32.mrf.mxu0
      %470 = vmatprep.mubr.bf16.mxu0 0
      %471 = vmatmul.mubr.bf16.gmra.mxu0 %v414
      %v472 = vpop.f32.mrf.mxu0
      %v473 = vadd.f32 %v373, %v472
      %v474 = vpop.f32.mrf.mxu0
      %v475 = vpop.f32.mrf.mxu0
      %v476 = vadd.f32 %v376, %v475
      %v477 = vpop.f32.mrf.mxu0
      %478 = vmatprep.mubr.bf16.mxu0 0
      %479 = vmatmul.mubr.bf16.gmra.mxu0 %v417
      %v480 = vpop.f32.mrf.mxu0
      %v481 = vadd.f32 %v381, %v480
      %v482 = vpop.f32.mrf.mxu0
      %v483 = vpop.f32.mrf.mxu0
      %v484 = vadd.f32 %v384, %v483
      %v485 = vpop.f32.mrf.mxu0
      %486 = vdwg.mxu0
      %v487 = vld [vmem:[%s241] sm:$0xf]
      %v488 = vld [vmem:[%s241 + $0x4] sm:$0x1]
      %v489 = vld [vmem:[%s241 + $0x8] sm:$0xf]
      %v490 = vld [vmem:[%s241 + $0xc] sm:$0x1]
      %v491 = vld [vmem:[%s241 + $0x10] sm:$0xf]
      %v492 = vld [vmem:[%s241 + $0x14] sm:$0x1]
      %v493 = vld [vmem:[%s241 + $0x18] sm:$0xf]
      %v494 = vld [vmem:[%s241 + $0x1c] sm:$0x1]
      %v495 = vld [vmem:[%s241 + $0x20] sm:$0xf]
      %v496 = vld [vmem:[%s241 + $0x24] sm:$0x1]
      %v497 = vld [vmem:[%s241 + $0x28] sm:$0xf]
      %v498 = vld [vmem:[%s241 + $0x2c] sm:$0x1]
      %v499 = vld [vmem:[%s241 + $0x30] sm:$0xf]
      %v500 = vld [vmem:[%s241 + $0x34] sm:$0x1]
      %v501 = vld [vmem:[%s241 + $0x38] sm:$0xf]
      %v502 = vld [vmem:[%s241 + $0x3c] sm:$0x1]
      %vm503 = vsmask.f32 3328
      %vm504 = vsmask.f32 7440
      %vm505 = vmor %vm503, %vm504
      %v507 = vshrl.u32 %v487, 16
      %v509 = vrot.slane %v507, 4
      %v510 = vshll.u32 %v487, 16
      %v512 = vrot.slane %v510, 5
      %v513 = vor.u32 %v509, %v512
      %v514 = vrot.slane %v513, 4
      %v516 = vshll.u32 %v488, 16
      %v518 = vrot.slane %v516, 5
      %v519 = vsel %vm505, %v514, %v518
      %v521 = vshrl.u32 %v489, 16
      %v523 = vrot.slane %v521, 4
      %v524 = vshll.u32 %v489, 16
      %v526 = vrot.slane %v524, 5
      %v527 = vor.u32 %v523, %v526
      %v528 = vrot.slane %v527, 4
      %v530 = vshll.u32 %v490, 16
      %v532 = vrot.slane %v530, 5
      %v533 = vsel %vm505, %v528, %v532
      %v535 = vshrl.u32 %v491, 16
      %v537 = vrot.slane %v535, 4
      %v538 = vshll.u32 %v491, 16
      %v540 = vrot.slane %v538, 5
      %v541 = vor.u32 %v537, %v540
      %v542 = vrot.slane %v541, 4
      %v544 = vshll.u32 %v492, 16
      %v546 = vrot.slane %v544, 5
      %v547 = vsel %vm505, %v542, %v546
      %v549 = vshrl.u32 %v493, 16
      %v551 = vrot.slane %v549, 4
      %v552 = vshll.u32 %v493, 16
      %v554 = vrot.slane %v552, 5
      %v555 = vor.u32 %v551, %v554
      %v556 = vrot.slane %v555, 4
      %v558 = vshll.u32 %v494, 16
      %v560 = vrot.slane %v558, 5
      %v561 = vsel %vm505, %v556, %v560
      %v563 = vshrl.u32 %v495, 16
      %v565 = vrot.slane %v563, 4
      %v566 = vshll.u32 %v495, 16
      %v568 = vrot.slane %v566, 5
      %v569 = vor.u32 %v565, %v568
      %v570 = vrot.slane %v569, 4
      %v572 = vshll.u32 %v496, 16
      %v574 = vrot.slane %v572, 5
      %v575 = vsel %vm505, %v570, %v574
      %v577 = vshrl.u32 %v497, 16
      %v579 = vrot.slane %v577, 4
      %v580 = vshll.u32 %v497, 16
      %v582 = vrot.slane %v580, 5
      %v583 = vor.u32 %v579, %v582
      %v584 = vrot.slane %v583, 4
      %v586 = vshll.u32 %v498, 16
      %v588 = vrot.slane %v586, 5
      %v589 = vsel %vm505, %v584, %v588
      %v591 = vshrl.u32 %v499, 16
      %v593 = vrot.slane %v591, 4
      %v594 = vshll.u32 %v499, 16
      %v596 = vrot.slane %v594, 5
      %v597 = vor.u32 %v593, %v596
      %v598 = vrot.slane %v597, 4
      %v600 = vshll.u32 %v500, 16
      %v602 = vrot.slane %v600, 5
      %v603 = vsel %vm505, %v598, %v602
      %v605 = vshrl.u32 %v501, 16
      %v607 = vrot.slane %v605, 4
      %v608 = vshll.u32 %v501, 16
      %v610 = vrot.slane %v608, 5
      %v611 = vor.u32 %v607, %v610
      %v612 = vrot.slane %v611, 4
      %v614 = vshll.u32 %v502, 16
      %v616 = vrot.slane %v614, 5
      %v617 = vsel %vm505, %v612, %v616
      %s618 = scalar_lea.vmem %s247, 4
      %v619 = vld [vmem:[%s618] sm:$0x3]
      %v620 = vunpack.c.l.b16 %v519
      %v621 = vunpack.c.l.b16 %v533
      %v622 = vunpack.c.l.b16 %v547
      %v623 = vunpack.c.l.b16 %v561
      %v624 = vunpack.c.l.b16 %v575
      %v625 = vunpack.c.l.b16 %v589
      %v626 = vunpack.c.l.b16 %v603
      %v627 = vunpack.c.l.b16 %v617
      %v628 = vpack.c.b16 %v621, %v620
      %v629 = vpack.c.b16 %v623, %v622
      %v630 = vpack.c.b16 %v625, %v624
      %v631 = vpack.c.b16 %v627, %v626
      %v633 = vsel %vm305, %v628, 0
      %v636 = vsel %vm305, %v629, 0
      %v639 = vsel %vm305, %v630, 0
      %v642 = vsel %vm305, %v631, 0
      %v645 = vsel %vm318, %v619, 0
      %647 = vmatprep.subr.bf16.mxu0 0
      %648 = vmatpush1.bf16.msra.mxu0 0
      %649 = vmatprep.subr.bf16.mxu0 0
      %650 = vmatpush1.bf16.msra.mxu0 0
      %651 = vmatprep.subr.bf16.mxu0 0
      %652 = vmatpush1.bf16.msra.mxu0 0
      %653 = vmatprep.subr.bf16.mxu0 0
      %654 = vmatpush1.bf16.msra.mxu0 0
      %655 = vmatprep.subr.bf16.mxu0 0
      %656 = vmatpush1.bf16.msra.mxu0 0
      %657 = vmatprep.subr.bf16.mxu0 0
      %658 = vmatpush1.bf16.msra.mxu0 0
      %659 = vmatprep.subr.bf16.mxu0 0
      %660 = vmatpush1.bf16.msra.mxu0 0
      %661 = vmatprep.subr.bf16.mxu0 0
      %662 = vmatpush1.bf16.msra.mxu0 %v645
      %663 = vmatprep.subr.bf16.mxu0 0
      %664 = vmatpush2.bf16.msra.mxu0 0
      %665 = vmatprep.subr.bf16.mxu0 0
      %666 = vmatpush2.bf16.msra.mxu0 0
      %667 = vmatprep.subr.bf16.mxu0 0
      %668 = vmatpush2.bf16.msra.mxu0 0
      %669 = vmatprep.subr.bf16.mxu0 0
      %670 = vmatpush2.bf16.msra.mxu0 0
      %671 = vmatprep.subr.bf16.mxu0 0
      %672 = vmatpush2.bf16.msra.mxu0 0
      %673 = vmatprep.subr.bf16.mxu0 0
      %674 = vmatpush2.bf16.msra.mxu0 0
      %675 = vmatprep.subr.bf16.mxu0 0
      %676 = vmatpush2.bf16.msra.mxu0 0
      %677 = vmatprep.subr.bf16.mxu0 0
      %678 = vmatpush2.bf16.msra.mxu0 0
      %679 = vmatprep.mubr.bf16.mxu0 0
      %680 = vmatmul.mubr.bf16.gmra.mxu0 %v633
      %v681 = vpop.f32.mrf.mxu0
      %v682 = vadd.f32 0.0, %v681
      %v683 = vpop.f32.mrf.mxu0
      %v684 = vpop.f32.mrf.mxu0
      %v685 = vadd.f32 0.0, %v684
      %v686 = vpop.f32.mrf.mxu0
      %687 = vmatprep.mubr.bf16.mxu0 0
      %688 = vmatmul.mubr.bf16.gmra.mxu0 %v636
      %v689 = vpop.f32.mrf.mxu0
      %v690 = vadd.f32 0.0, %v689
      %v691 = vpop.f32.mrf.mxu0
      %v692 = vpop.f32.mrf.mxu0
      %v693 = vadd.f32 0.0, %v692
      %v694 = vpop.f32.mrf.mxu0
      %695 = vmatprep.mubr.bf16.mxu0 0
      %696 = vmatmul.mubr.bf16.gmra.mxu0 %v639
      %v697 = vpop.f32.mrf.mxu0
      %v698 = vadd.f32 0.0, %v697
      %v699 = vpop.f32.mrf.mxu0
      %v700 = vpop.f32.mrf.mxu0
      %v701 = vadd.f32 0.0, %v700
      %v702 = vpop.f32.mrf.mxu0
      %703 = vmatprep.mubr.bf16.mxu0 0
      %704 = vmatmul.mubr.bf16.gmra.mxu0 %v642
      %v705 = vpop.f32.mrf.mxu0
      %v706 = vadd.f32 0.0, %v705
      %v707 = vpop.f32.mrf.mxu0
      %v708 = vpop.f32.mrf.mxu0
      %v709 = vadd.f32 0.0, %v708
      %v710 = vpop.f32.mrf.mxu0
      %711 = vdwg.mxu0
      %v712 = vadd.f32 %v457, %v682
      %v713 = vadd.f32 %v460, %v685
      %v714 = vadd.f32 %v465, %v690
      %v715 = vadd.f32 %v468, %v693
      %v716 = vadd.f32 %v473, %v698
      %v717 = vadd.f32 %v476, %v701
      %v718 = vadd.f32 %v481, %v706
      %v719 = vadd.f32 %v484, %v709
      %v720 = vld [vmem:[%s274] sm:$0xf]
      %v721 = vld [vmem:[%s274 + $0x4] sm:$0x1]
      %v722 = vld [vmem:[%s274 + $0x8] sm:$0xf]
      %v723 = vld [vmem:[%s274 + $0xc] sm:$0x1]
      %v724 = vld [vmem:[%s274 + $0x10] sm:$0xf]
      %v725 = vld [vmem:[%s274 + $0x14] sm:$0x1]
      %v726 = vld [vmem:[%s274 + $0x18] sm:$0xf]
      %v727 = vld [vmem:[%s274 + $0x1c] sm:$0x1]
      %v728 = vld [vmem:[%s274 + $0x20] sm:$0xf]
      %v729 = vld [vmem:[%s274 + $0x24] sm:$0x1]
      %v730 = vld [vmem:[%s274 + $0x28] sm:$0xf]
      %v731 = vld [vmem:[%s274 + $0x2c] sm:$0x1]
      %v732 = vld [vmem:[%s274 + $0x30] sm:$0xf]
      %v733 = vld [vmem:[%s274 + $0x34] sm:$0x1]
      %v734 = vld [vmem:[%s274 + $0x38] sm:$0xf]
      %v735 = vld [vmem:[%s274 + $0x3c] sm:$0x1]
      %v737 = vshrl.u32 %v720, 16
      %v739 = vrot.slane %v737, 4
      %v740 = vshll.u32 %v720, 16
      %v742 = vrot.slane %v740, 5
      %v743 = vor.u32 %v739, %v742
      %v744 = vrot.slane %v743, 4
      %v746 = vshll.u32 %v721, 16
      %v748 = vrot.slane %v746, 5
      %v749 = vsel %vm505, %v744, %v748
      %v751 = vshrl.u32 %v722, 16
      %v753 = vrot.slane %v751, 4
      %v754 = vshll.u32 %v722, 16
      %v756 = vrot.slane %v754, 5
      %v757 = vor.u32 %v753, %v756
      %v758 = vrot.slane %v757, 4
      %v760 = vshll.u32 %v723, 16
      %v762 = vrot.slane %v760, 5
      %v763 = vsel %vm505, %v758, %v762
      %v765 = vshrl.u32 %v724, 16
      %v767 = vrot.slane %v765, 4
      %v768 = vshll.u32 %v724, 16
      %v770 = vrot.slane %v768, 5
      %v771 = vor.u32 %v767, %v770
      %v772 = vrot.slane %v771, 4
      %v774 = vshll.u32 %v725, 16
      %v776 = vrot.slane %v774, 5
      %v777 = vsel %vm505, %v772, %v776
      %v779 = vshrl.u32 %v726, 16
      %v781 = vrot.slane %v779, 4
      %v782 = vshll.u32 %v726, 16
      %v784 = vrot.slane %v782, 5
      %v785 = vor.u32 %v781, %v784
      %v786 = vrot.slane %v785, 4
      %v788 = vshll.u32 %v727, 16
      %v790 = vrot.slane %v788, 5
      %v791 = vsel %vm505, %v786, %v790
      %v793 = vshrl.u32 %v728, 16
      %v795 = vrot.slane %v793, 4
      %v796 = vshll.u32 %v728, 16
      %v798 = vrot.slane %v796, 5
      %v799 = vor.u32 %v795, %v798
      %v800 = vrot.slane %v799, 4
      %v802 = vshll.u32 %v729, 16
      %v804 = vrot.slane %v802, 5
      %v805 = vsel %vm505, %v800, %v804
      %v807 = vshrl.u32 %v730, 16
      %v809 = vrot.slane %v807, 4
      %v810 = vshll.u32 %v730, 16
      %v812 = vrot.slane %v810, 5
      %v813 = vor.u32 %v809, %v812
      %v814 = vrot.slane %v813, 4
      %v816 = vshll.u32 %v731, 16
      %v818 = vrot.slane %v816, 5
      %v819 = vsel %vm505, %v814, %v818
      %v821 = vshrl.u32 %v732, 16
      %v823 = vrot.slane %v821, 4
      %v824 = vshll.u32 %v732, 16
      %v826 = vrot.slane %v824, 5
      %v827 = vor.u32 %v823, %v826
      %v828 = vrot.slane %v827, 4
      %v830 = vshll.u32 %v733, 16
      %v832 = vrot.slane %v830, 5
      %v833 = vsel %vm505, %v828, %v832
      %v835 = vshrl.u32 %v734, 16
      %v837 = vrot.slane %v835, 4
      %v838 = vshll.u32 %v734, 16
      %v840 = vrot.slane %v838, 5
      %v841 = vor.u32 %v837, %v840
      %v842 = vrot.slane %v841, 4
      %v844 = vshll.u32 %v735, 16
      %v846 = vrot.slane %v844, 5
      %v847 = vsel %vm505, %v842, %v846
      %s848 = scalar_lea.vmem %s247, 6
      %v849 = vld [vmem:[%s848] sm:$0x3]
      %v850 = vunpack.c.l.b16 %v749
      %v851 = vunpack.c.l.b16 %v763
      %v852 = vunpack.c.l.b16 %v777
      %v853 = vunpack.c.l.b16 %v791
      %v854 = vunpack.c.l.b16 %v805
      %v855 = vunpack.c.l.b16 %v819
      %v856 = vunpack.c.l.b16 %v833
      %v857 = vunpack.c.l.b16 %v847
      %v858 = vpack.c.b16 %v851, %v850
      %v859 = vpack.c.b16 %v853, %v852
      %v860 = vpack.c.b16 %v855, %v854
      %v861 = vpack.c.b16 %v857, %v856
      %v863 = vsel %vm305, %v858, 0
      %v866 = vsel %vm305, %v859, 0
      %v869 = vsel %vm305, %v860, 0
      %v872 = vsel %vm305, %v861, 0
      %v875 = vsel %vm318, %v849, 0
      %877 = vmatprep.subr.bf16.mxu0 0
      %878 = vmatpush1.bf16.msra.mxu0 0
      %879 = vmatprep.subr.bf16.mxu0 0
      %880 = vmatpush1.bf16.msra.mxu0 0
      %881 = vmatprep.subr.bf16.mxu0 0
      %882 = vmatpush1.bf16.msra.mxu0 0
      %883 = vmatprep.subr.bf16.mxu0 0
      %884 = vmatpush1.bf16.msra.mxu0 0
      %885 = vmatprep.subr.bf16.mxu0 0
      %886 = vmatpush1.bf16.msra.mxu0 0
      %887 = vmatprep.subr.bf16.mxu0 0
      %888 = vmatpush1.bf16.msra.mxu0 0
      %889 = vmatprep.subr.bf16.mxu0 0
      %890 = vmatpush1.bf16.msra.mxu0 0
      %891 = vmatprep.subr.bf16.mxu0 0
      %892 = vmatpush1.bf16.msra.mxu0 %v875
      %893 = vmatprep.subr.bf16.mxu0 0
      %894 = vmatpush2.bf16.msra.mxu0 0
      %895 = vmatprep.subr.bf16.mxu0 0
      %896 = vmatpush2.bf16.msra.mxu0 0
      %897 = vmatprep.subr.bf16.mxu0 0
      %898 = vmatpush2.bf16.msra.mxu0 0
      %899 = vmatprep.subr.bf16.mxu0 0
      %900 = vmatpush2.bf16.msra.mxu0 0
      %901 = vmatprep.subr.bf16.mxu0 0
      %902 = vmatpush2.bf16.msra.mxu0 0
      %903 = vmatprep.subr.bf16.mxu0 0
      %904 = vmatpush2.bf16.msra.mxu0 0
      %905 = vmatprep.subr.bf16.mxu0 0
      %906 = vmatpush2.bf16.msra.mxu0 0
      %907 = vmatprep.subr.bf16.mxu0 0
      %908 = vmatpush2.bf16.msra.mxu0 0
      %909 = vmatprep.mubr.bf16.mxu0 0
      %910 = vmatmul.mubr.bf16.gmra.mxu0 %v863
      %v911 = vpop.f32.mrf.mxu0
      %v912 = vadd.f32 0.0, %v911
      %v913 = vpop.f32.mrf.mxu0
      %v914 = vpop.f32.mrf.mxu0
      %v915 = vadd.f32 0.0, %v914
      %v916 = vpop.f32.mrf.mxu0
      %917 = vmatprep.mubr.bf16.mxu0 0
      %918 = vmatmul.mubr.bf16.gmra.mxu0 %v866
      %v919 = vpop.f32.mrf.mxu0
      %v920 = vadd.f32 0.0, %v919
      %v921 = vpop.f32.mrf.mxu0
      %v922 = vpop.f32.mrf.mxu0
      %v923 = vadd.f32 0.0, %v922
      %v924 = vpop.f32.mrf.mxu0
      %925 = vmatprep.mubr.bf16.mxu0 0
      %926 = vmatmul.mubr.bf16.gmra.mxu0 %v869
      %v927 = vpop.f32.mrf.mxu0
      %v928 = vadd.f32 0.0, %v927
      %v929 = vpop.f32.mrf.mxu0
      %v930 = vpop.f32.mrf.mxu0
      %v931 = vadd.f32 0.0, %v930
      %v932 = vpop.f32.mrf.mxu0
      %933 = vmatprep.mubr.bf16.mxu0 0
      %934 = vmatmul.mubr.bf16.gmra.mxu0 %v872
      %v935 = vpop.f32.mrf.mxu0
      %v936 = vadd.f32 0.0, %v935
      %v937 = vpop.f32.mrf.mxu0
      %v938 = vpop.f32.mrf.mxu0
      %v939 = vadd.f32 0.0, %v938
      %v940 = vpop.f32.mrf.mxu0
      %941 = vdwg.mxu0
      %v942 = vadd.f32 %v712, %v912
      %v943 = vadd.f32 %v713, %v915
      %v944 = vadd.f32 %v714, %v920
      %v945 = vadd.f32 %v715, %v923
      %v946 = vadd.f32 %v716, %v928
      %v947 = vadd.f32 %v717, %v931
      %v948 = vadd.f32 %v718, %v936
      %v949 = vadd.f32 %v719, %v939
      %s950 = scalar_lea.vmem %s241, 128
      %v951 = vld [vmem:[%s950] sm:$0xf]
      %v952 = vld [vmem:[%s950 + $0x8] sm:$0xf]
      %v953 = vld [vmem:[%s950 + $0x10] sm:$0xf]
      %v954 = vld [vmem:[%s950 + $0x18] sm:$0xf]
      %v955 = vld [vmem:[%s950 + $0x20] sm:$0xf]
      %v956 = vld [vmem:[%s950 + $0x28] sm:$0xf]
      %v957 = vld [vmem:[%s950 + $0x30] sm:$0xf]
      %v958 = vld [vmem:[%s950 + $0x38] sm:$0xf]
      %s959 = scalar_lea.vmem %s247, 8
      %v960 = vld [vmem:[%s959] sm:$0x3]
      %v969 = vunpack.c.l.b16 %v951
      %v970 = vunpack.c.l.b16 %v952
      %v971 = vunpack.c.l.b16 %v953
      %v972 = vunpack.c.l.b16 %v954
      %v973 = vunpack.c.l.b16 %v955
      %v974 = vunpack.c.l.b16 %v956
      %v975 = vunpack.c.l.b16 %v957
      %v976 = vunpack.c.l.b16 %v958
      %v977 = vpack.c.b16 %v970, %v969
      %v978 = vpack.c.b16 %v972, %v971
      %v979 = vpack.c.b16 %v974, %v973
      %v980 = vpack.c.b16 %v976, %v975
      %v982 = vsel %vm305, %v977, 0
      %v985 = vsel %vm305, %v978, 0
      %v988 = vsel %vm305, %v979, 0
      %v991 = vsel %vm305, %v980, 0
      %v994 = vsel %vm318, %v960, 0
      %996 = vmatprep.subr.bf16.mxu0 0
      %997 = vmatpush1.bf16.msra.mxu0 0
      %998 = vmatprep.subr.bf16.mxu0 0
      %999 = vmatpush1.bf16.msra.mxu0 0
      %1000 = vmatprep.subr.bf16.mxu0 0
      %1001 = vmatpush1.bf16.msra.mxu0 0
      %1002 = vmatprep.subr.bf16.mxu0 0
      %1003 = vmatpush1.bf16.msra.mxu0 0
      %1004 = vmatprep.subr.bf16.mxu0 0
      %1005 = vmatpush1.bf16.msra.mxu0 0
      %1006 = vmatprep.subr.bf16.mxu0 0
      %1007 = vmatpush1.bf16.msra.mxu0 0
      %1008 = vmatprep.subr.bf16.mxu0 0
      %1009 = vmatpush1.bf16.msra.mxu0 0
      %1010 = vmatprep.subr.bf16.mxu0 0
      %1011 = vmatpush1.bf16.msra.mxu0 %v994
      %1012 = vmatprep.subr.bf16.mxu0 0
      %1013 = vmatpush2.bf16.msra.mxu0 0
      %1014 = vmatprep.subr.bf16.mxu0 0
      %1015 = vmatpush2.bf16.msra.mxu0 0
      %1016 = vmatprep.subr.bf16.mxu0 0
      %1017 = vmatpush2.bf16.msra.mxu0 0
      %1018 = vmatprep.subr.bf16.mxu0 0
      %1019 = vmatpush2.bf16.msra.mxu0 0
      %1020 = vmatprep.subr.bf16.mxu0 0
      %1021 = vmatpush2.bf16.msra.mxu0 0
      %1022 = vmatprep.subr.bf16.mxu0 0
      %1023 = vmatpush2.bf16.msra.mxu0 0
      %1024 = vmatprep.subr.bf16.mxu0 0
      %1025 = vmatpush2.bf16.msra.mxu0 0
      %1026 = vmatprep.subr.bf16.mxu0 0
      %1027 = vmatpush2.bf16.msra.mxu0 0
      %1028 = vmatprep.mubr.bf16.mxu0 0
      %1029 = vmatmul.mubr.bf16.gmra.mxu0 %v982
      %v1030 = vpop.f32.mrf.mxu0
      %v1031 = vadd.f32 0.0, %v1030
      %v1032 = vpop.f32.mrf.mxu0
      %v1033 = vpop.f32.mrf.mxu0
      %v1034 = vadd.f32 0.0, %v1033
      %v1035 = vpop.f32.mrf.mxu0
      %1036 = vmatprep.mubr.bf16.mxu0 0
      %1037 = vmatmul.mubr.bf16.gmra.mxu0 %v985
      %v1038 = vpop.f32.mrf.mxu0
      %v1039 = vadd.f32 0.0, %v1038
      %v1040 = vpop.f32.mrf.mxu0
      %v1041 = vpop.f32.mrf.mxu0
      %v1042 = vadd.f32 0.0, %v1041
      %v1043 = vpop.f32.mrf.mxu0
      %1044 = vmatprep.mubr.bf16.mxu0 0
      %1045 = vmatmul.mubr.bf16.gmra.mxu0 %v988
      %v1046 = vpop.f32.mrf.mxu0
      %v1047 = vadd.f32 0.0, %v1046
      %v1048 = vpop.f32.mrf.mxu0
      %v1049 = vpop.f32.mrf.mxu0
      %v1050 = vadd.f32 0.0, %v1049
      %v1051 = vpop.f32.mrf.mxu0
      %1052 = vmatprep.mubr.bf16.mxu0 0
      %1053 = vmatmul.mubr.bf16.gmra.mxu0 %v991
      %v1054 = vpop.f32.mrf.mxu0
      %v1055 = vadd.f32 0.0, %v1054
      %v1056 = vpop.f32.mrf.mxu0
      %v1057 = vpop.f32.mrf.mxu0
      %v1058 = vadd.f32 0.0, %v1057
      %v1059 = vpop.f32.mrf.mxu0
      %1060 = vdwg.mxu0
      %v1061 = vadd.f32 %v942, %v1031
      %v1062 = vadd.f32 %v943, %v1034
      %v1063 = vadd.f32 %v944, %v1039
      %v1064 = vadd.f32 %v945, %v1042
      %v1065 = vadd.f32 %v946, %v1047
      %v1066 = vadd.f32 %v947, %v1050
      %v1067 = vadd.f32 %v948, %v1055
      %v1068 = vadd.f32 %v949, %v1058
      %s1069 = scalar_lea.vmem %s241, 192
      %v1070 = vld [vmem:[%s1069] sm:$0xf]
      %v1071 = vld [vmem:[%s1069 + $0x8] sm:$0xf]
      %v1072 = vld [vmem:[%s1069 + $0x10] sm:$0xf]
      %v1073 = vld [vmem:[%s1069 + $0x18] sm:$0xf]
      %v1074 = vld [vmem:[%s1069 + $0x20] sm:$0xf]
      %v1075 = vld [vmem:[%s1069 + $0x28] sm:$0xf]
      %v1076 = vld [vmem:[%s1069 + $0x30] sm:$0xf]
      %v1077 = vld [vmem:[%s1069 + $0x38] sm:$0xf]
      %s1078 = scalar_lea.vmem %s247, 10
      %v1079 = vld [vmem:[%s1078] sm:$0x3]
      %v1088 = vunpack.c.l.b16 %v1070
      %v1089 = vunpack.c.l.b16 %v1071
      %v1090 = vunpack.c.l.b16 %v1072
      %v1091 = vunpack.c.l.b16 %v1073
      %v1092 = vunpack.c.l.b16 %v1074
      %v1093 = vunpack.c.l.b16 %v1075
      %v1094 = vunpack.c.l.b16 %v1076
      %v1095 = vunpack.c.l.b16 %v1077
      %v1096 = vpack.c.b16 %v1089, %v1088
      %v1097 = vpack.c.b16 %v1091, %v1090
      %v1098 = vpack.c.b16 %v1093, %v1092
      %v1099 = vpack.c.b16 %v1095, %v1094
      %v1101 = vsel %vm305, %v1096, 0
      %v1104 = vsel %vm305, %v1097, 0
      %v1107 = vsel %vm305, %v1098, 0
      %v1110 = vsel %vm305, %v1099, 0
      %v1113 = vsel %vm318, %v1079, 0
      %1115 = vmatprep.subr.bf16.mxu0 0
      %1116 = vmatpush1.bf16.msra.mxu0 0
      %1117 = vmatprep.subr.bf16.mxu0 0
      %1118 = vmatpush1.bf16.msra.mxu0 0
      %1119 = vmatprep.subr.bf16.mxu0 0
      %1120 = vmatpush1.bf16.msra.mxu0 0
      %1121 = vmatprep.subr.bf16.mxu0 0
      %1122 = vmatpush1.bf16.msra.mxu0 0
      %1123 = vmatprep.subr.bf16.mxu0 0
      %1124 = vmatpush1.bf16.msra.mxu0 0
      %1125 = vmatprep.subr.bf16.mxu0 0
      %1126 = vmatpush1.bf16.msra.mxu0 0
      %1127 = vmatprep.subr.bf16.mxu0 0
      %1128 = vmatpush1.bf16.msra.mxu0 0
      %1129 = vmatprep.subr.bf16.mxu0 0
      %1130 = vmatpush1.bf16.msra.mxu0 %v1113
      %1131 = vmatprep.subr.bf16.mxu0 0
      %1132 = vmatpush2.bf16.msra.mxu0 0
      %1133 = vmatprep.subr.bf16.mxu0 0
      %1134 = vmatpush2.bf16.msra.mxu0 0
      %1135 = vmatprep.subr.bf16.mxu0 0
      %1136 = vmatpush2.bf16.msra.mxu0 0
      %1137 = vmatprep.subr.bf16.mxu0 0
      %1138 = vmatpush2.bf16.msra.mxu0 0
      %1139 = vmatprep.subr.bf16.mxu0 0
      %1140 = vmatpush2.bf16.msra.mxu0 0
      %1141 = vmatprep.subr.bf16.mxu0 0
      %1142 = vmatpush2.bf16.msra.mxu0 0
      %1143 = vmatprep.subr.bf16.mxu0 0
      %1144 = vmatpush2.bf16.msra.mxu0 0
      %1145 = vmatprep.subr.bf16.mxu0 0
      %1146 = vmatpush2.bf16.msra.mxu0 0
      %1147 = vmatprep.mubr.bf16.mxu0 0
      %1148 = vmatmul.mubr.bf16.gmra.mxu0 %v1101
      %v1149 = vpop.f32.mrf.mxu0
      %v1150 = vadd.f32 0.0, %v1149
      %v1151 = vpop.f32.mrf.mxu0
      %v1152 = vpop.f32.mrf.mxu0
      %v1153 = vadd.f32 0.0, %v1152
      %v1154 = vpop.f32.mrf.mxu0
      %1155 = vmatprep.mubr.bf16.mxu0 0
      %1156 = vmatmul.mubr.bf16.gmra.mxu0 %v1104
      %v1157 = vpop.f32.mrf.mxu0
      %v1158 = vadd.f32 0.0, %v1157
      %v1159 = vpop.f32.mrf.mxu0
      %v1160 = vpop.f32.mrf.mxu0
      %v1161 = vadd.f32 0.0, %v1160
      %v1162 = vpop.f32.mrf.mxu0
      %1163 = vmatprep.mubr.bf16.mxu0 0
      %1164 = vmatmul.mubr.bf16.gmra.mxu0 %v1107
      %v1165 = vpop.f32.mrf.mxu0
      %v1166 = vadd.f32 0.0, %v1165
      %v1167 = vpop.f32.mrf.mxu0
      %v1168 = vpop.f32.mrf.mxu0
      %v1169 = vadd.f32 0.0, %v1168
      %v1170 = vpop.f32.mrf.mxu0
      %1171 = vmatprep.mubr.bf16.mxu0 0
      %1172 = vmatmul.mubr.bf16.gmra.mxu0 %v1110
      %v1173 = vpop.f32.mrf.mxu0
      %v1174 = vadd.f32 0.0, %v1173
      %v1175 = vpop.f32.mrf.mxu0
      %v1176 = vpop.f32.mrf.mxu0
      %v1177 = vadd.f32 0.0, %v1176
      %v1178 = vpop.f32.mrf.mxu0
      %1179 = vdwg.mxu0
      %v1180 = vadd.f32 %v1061, %v1150
      %v1181 = vadd.f32 %v1062, %v1153
      %v1182 = vadd.f32 %v1063, %v1158
      %v1183 = vadd.f32 %v1064, %v1161
      %v1184 = vadd.f32 %v1065, %v1166
      %v1185 = vadd.f32 %v1066, %v1169
      %v1186 = vadd.f32 %v1067, %v1174
      %v1187 = vadd.f32 %v1068, %v1177
      %v1188 = vld [vmem:[%s950] sm:$0xf]
      %v1189 = vld [vmem:[%s950 + $0x4] sm:$0x1]
      %v1190 = vld [vmem:[%s950 + $0x8] sm:$0xf]
      %v1191 = vld [vmem:[%s950 + $0xc] sm:$0x1]
      %v1192 = vld [vmem:[%s950 + $0x10] sm:$0xf]
      %v1193 = vld [vmem:[%s950 + $0x14] sm:$0x1]
      %v1194 = vld [vmem:[%s950 + $0x18] sm:$0xf]
      %v1195 = vld [vmem:[%s950 + $0x1c] sm:$0x1]
      %v1196 = vld [vmem:[%s950 + $0x20] sm:$0xf]
      %v1197 = vld [vmem:[%s950 + $0x24] sm:$0x1]
      %v1198 = vld [vmem:[%s950 + $0x28] sm:$0xf]
      %v1199 = vld [vmem:[%s950 + $0x2c] sm:$0x1]
      %v1200 = vld [vmem:[%s950 + $0x30] sm:$0xf]
      %v1201 = vld [vmem:[%s950 + $0x34] sm:$0x1]
      %v1202 = vld [vmem:[%s950 + $0x38] sm:$0xf]
      %v1203 = vld [vmem:[%s950 + $0x3c] sm:$0x1]
      %v1205 = vshrl.u32 %v1188, 16
      %v1207 = vrot.slane %v1205, 4
      %v1208 = vshll.u32 %v1188, 16
      %v1210 = vrot.slane %v1208, 5
      %v1211 = vor.u32 %v1207, %v1210
      %v1212 = vrot.slane %v1211, 4
      %v1214 = vshll.u32 %v1189, 16
      %v1216 = vrot.slane %v1214, 5
      %v1217 = vsel %vm505, %v1212, %v1216
      %v1219 = vshrl.u32 %v1190, 16
      %v1221 = vrot.slane %v1219, 4
      %v1222 = vshll.u32 %v1190, 16
      %v1224 = vrot.slane %v1222, 5
      %v1225 = vor.u32 %v1221, %v1224
      %v1226 = vrot.slane %v1225, 4
      %v1228 = vshll.u32 %v1191, 16
      %v1230 = vrot.slane %v1228, 5
      %v1231 = vsel %vm505, %v1226, %v1230
      %v1233 = vshrl.u32 %v1192, 16
      %v1235 = vrot.slane %v1233, 4
      %v1236 = vshll.u32 %v1192, 16
      %v1238 = vrot.slane %v1236, 5
      %v1239 = vor.u32 %v1235, %v1238
      %v1240 = vrot.slane %v1239, 4
      %v1242 = vshll.u32 %v1193, 16
      %v1244 = vrot.slane %v1242, 5
      %v1245 = vsel %vm505, %v1240, %v1244
      %v1247 = vshrl.u32 %v1194, 16
      %v1249 = vrot.slane %v1247, 4
      %v1250 = vshll.u32 %v1194, 16
      %v1252 = vrot.slane %v1250, 5
      %v1253 = vor.u32 %v1249, %v1252
      %v1254 = vrot.slane %v1253, 4
      %v1256 = vshll.u32 %v1195, 16
      %v1258 = vrot.slane %v1256, 5
      %v1259 = vsel %vm505, %v1254, %v1258
      %v1261 = vshrl.u32 %v1196, 16
      %v1263 = vrot.slane %v1261, 4
      %v1264 = vshll.u32 %v1196, 16
      %v1266 = vrot.slane %v1264, 5
      %v1267 = vor.u32 %v1263, %v1266
      %v1268 = vrot.slane %v1267, 4
      %v1270 = vshll.u32 %v1197, 16
      %v1272 = vrot.slane %v1270, 5
      %v1273 = vsel %vm505, %v1268, %v1272
      %v1275 = vshrl.u32 %v1198, 16
      %v1277 = vrot.slane %v1275, 4
      %v1278 = vshll.u32 %v1198, 16
      %v1280 = vrot.slane %v1278, 5
      %v1281 = vor.u32 %v1277, %v1280
      %v1282 = vrot.slane %v1281, 4
      %v1284 = vshll.u32 %v1199, 16
      %v1286 = vrot.slane %v1284, 5
      %v1287 = vsel %vm505, %v1282, %v1286
      %v1289 = vshrl.u32 %v1200, 16
      %v1291 = vrot.slane %v1289, 4
      %v1292 = vshll.u32 %v1200, 16
      %v1294 = vrot.slane %v1292, 5
      %v1295 = vor.u32 %v1291, %v1294
      %v1296 = vrot.slane %v1295, 4
      %v1298 = vshll.u32 %v1201, 16
      %v1300 = vrot.slane %v1298, 5
      %v1301 = vsel %vm505, %v1296, %v1300
      %v1303 = vshrl.u32 %v1202, 16
      %v1305 = vrot.slane %v1303, 4
      %v1306 = vshll.u32 %v1202, 16
      %v1308 = vrot.slane %v1306, 5
      %v1309 = vor.u32 %v1305, %v1308
      %v1310 = vrot.slane %v1309, 4
      %v1312 = vshll.u32 %v1203, 16
      %v1314 = vrot.slane %v1312, 5
      %v1315 = vsel %vm505, %v1310, %v1314
      %s1316 = scalar_lea.vmem %s247, 12
      %v1317 = vld [vmem:[%s1316] sm:$0x3]
      %v1318 = vunpack.c.l.b16 %v1217
      %v1319 = vunpack.c.l.b16 %v1231
      %v1320 = vunpack.c.l.b16 %v1245
      %v1321 = vunpack.c.l.b16 %v1259
      %v1322 = vunpack.c.l.b16 %v1273
      %v1323 = vunpack.c.l.b16 %v1287
      %v1324 = vunpack.c.l.b16 %v1301
      %v1325 = vunpack.c.l.b16 %v1315
      %v1326 = vpack.c.b16 %v1319, %v1318
      %v1327 = vpack.c.b16 %v1321, %v1320
      %v1328 = vpack.c.b16 %v1323, %v1322
      %v1329 = vpack.c.b16 %v1325, %v1324
      %v1331 = vsel %vm305, %v1326, 0
      %v1334 = vsel %vm305, %v1327, 0
      %v1337 = vsel %vm305, %v1328, 0
      %v1340 = vsel %vm305, %v1329, 0
      %v1343 = vsel %vm318, %v1317, 0
      %1345 = vmatprep.subr.bf16.mxu0 0
      %1346 = vmatpush1.bf16.msra.mxu0 0
      %1347 = vmatprep.subr.bf16.mxu0 0
      %1348 = vmatpush1.bf16.msra.mxu0 0
      %1349 = vmatprep.subr.bf16.mxu0 0
      %1350 = vmatpush1.bf16.msra.mxu0 0
      %1351 = vmatprep.subr.bf16.mxu0 0
      %1352 = vmatpush1.bf16.msra.mxu0 0
      %1353 = vmatprep.subr.bf16.mxu0 0
      %1354 = vmatpush1.bf16.msra.mxu0 0
      %1355 = vmatprep.subr.bf16.mxu0 0
      %1356 = vmatpush1.bf16.msra.mxu0 0
      %1357 = vmatprep.subr.bf16.mxu0 0
      %1358 = vmatpush1.bf16.msra.mxu0 0
      %1359 = vmatprep.subr.bf16.mxu0 0
      %1360 = vmatpush1.bf16.msra.mxu0 %v1343
      %1361 = vmatprep.subr.bf16.mxu0 0
      %1362 = vmatpush2.bf16.msra.mxu0 0
      %1363 = vmatprep.subr.bf16.mxu0 0
      %1364 = vmatpush2.bf16.msra.mxu0 0
      %1365 = vmatprep.subr.bf16.mxu0 0
      %1366 = vmatpush2.bf16.msra.mxu0 0
      %1367 = vmatprep.subr.bf16.mxu0 0
      %1368 = vmatpush2.bf16.msra.mxu0 0
      %1369 = vmatprep.subr.bf16.mxu0 0
      %1370 = vmatpush2.bf16.msra.mxu0 0
      %1371 = vmatprep.subr.bf16.mxu0 0
      %1372 = vmatpush2.bf16.msra.mxu0 0
      %1373 = vmatprep.subr.bf16.mxu0 0
      %1374 = vmatpush2.bf16.msra.mxu0 0
      %1375 = vmatprep.subr.bf16.mxu0 0
      %1376 = vmatpush2.bf16.msra.mxu0 0
      %1377 = vmatprep.mubr.bf16.mxu0 0
      %1378 = vmatmul.mubr.bf16.gmra.mxu0 %v1331
      %v1379 = vpop.f32.mrf.mxu0
      %v1380 = vadd.f32 0.0, %v1379
      %v1381 = vpop.f32.mrf.mxu0
      %v1382 = vpop.f32.mrf.mxu0
      %v1383 = vadd.f32 0.0, %v1382
      %v1384 = vpop.f32.mrf.mxu0
      %1385 = vmatprep.mubr.bf16.mxu0 0
      %1386 = vmatmul.mubr.bf16.gmra.mxu0 %v1334
      %v1387 = vpop.f32.mrf.mxu0
      %v1388 = vadd.f32 0.0, %v1387
      %v1389 = vpop.f32.mrf.mxu0
      %v1390 = vpop.f32.mrf.mxu0
      %v1391 = vadd.f32 0.0, %v1390
      %v1392 = vpop.f32.mrf.mxu0
      %1393 = vmatprep.mubr.bf16.mxu0 0
      %1394 = vmatmul.mubr.bf16.gmra.mxu0 %v1337
      %v1395 = vpop.f32.mrf.mxu0
      %v1396 = vadd.f32 0.0, %v1395
      %v1397 = vpop.f32.mrf.mxu0
      %v1398 = vpop.f32.mrf.mxu0
      %v1399 = vadd.f32 0.0, %v1398
      %v1400 = vpop.f32.mrf.mxu0
      %1401 = vmatprep.mubr.bf16.mxu0 0
      %1402 = vmatmul.mubr.bf16.gmra.mxu0 %v1340
      %v1403 = vpop.f32.mrf.mxu0
      %v1404 = vadd.f32 0.0, %v1403
      %v1405 = vpop.f32.mrf.mxu0
      %v1406 = vpop.f32.mrf.mxu0
      %v1407 = vadd.f32 0.0, %v1406
      %v1408 = vpop.f32.mrf.mxu0
      %1409 = vdwg.mxu0
      %v1410 = vadd.f32 %v1180, %v1380
      %v1411 = vadd.f32 %v1181, %v1383
      %v1412 = vadd.f32 %v1182, %v1388
      %v1413 = vadd.f32 %v1183, %v1391
      %v1414 = vadd.f32 %v1184, %v1396
      %v1415 = vadd.f32 %v1185, %v1399
      %v1416 = vadd.f32 %v1186, %v1404
      %v1417 = vadd.f32 %v1187, %v1407
      %v1418 = vld [vmem:[%s1069] sm:$0xf]
      %v1419 = vld [vmem:[%s1069 + $0x4] sm:$0x1]
      %v1420 = vld [vmem:[%s1069 + $0x8] sm:$0xf]
      %v1421 = vld [vmem:[%s1069 + $0xc] sm:$0x1]
      %v1422 = vld [vmem:[%s1069 + $0x10] sm:$0xf]
      %v1423 = vld [vmem:[%s1069 + $0x14] sm:$0x1]
      %v1424 = vld [vmem:[%s1069 + $0x18] sm:$0xf]
      %v1425 = vld [vmem:[%s1069 + $0x1c] sm:$0x1]
      %v1426 = vld [vmem:[%s1069 + $0x20] sm:$0xf]
      %v1427 = vld [vmem:[%s1069 + $0x24] sm:$0x1]
      %v1428 = vld [vmem:[%s1069 + $0x28] sm:$0xf]
      %v1429 = vld [vmem:[%s1069 + $0x2c] sm:$0x1]
      %v1430 = vld [vmem:[%s1069 + $0x30] sm:$0xf]
      %v1431 = vld [vmem:[%s1069 + $0x34] sm:$0x1]
      %v1432 = vld [vmem:[%s1069 + $0x38] sm:$0xf]
      %v1433 = vld [vmem:[%s1069 + $0x3c] sm:$0x1]
      %v1435 = vshrl.u32 %v1418, 16
      %v1437 = vrot.slane %v1435, 4
      %v1438 = vshll.u32 %v1418, 16
      %v1440 = vrot.slane %v1438, 5
      %v1441 = vor.u32 %v1437, %v1440
      %v1442 = vrot.slane %v1441, 4
      %v1444 = vshll.u32 %v1419, 16
      %v1446 = vrot.slane %v1444, 5
      %v1447 = vsel %vm505, %v1442, %v1446
      %v1449 = vshrl.u32 %v1420, 16
      %v1451 = vrot.slane %v1449, 4
      %v1452 = vshll.u32 %v1420, 16
      %v1454 = vrot.slane %v1452, 5
      %v1455 = vor.u32 %v1451, %v1454
      %v1456 = vrot.slane %v1455, 4
      %v1458 = vshll.u32 %v1421, 16
      %v1460 = vrot.slane %v1458, 5
      %v1461 = vsel %vm505, %v1456, %v1460
      %v1463 = vshrl.u32 %v1422, 16
      %v1465 = vrot.slane %v1463, 4
      %v1466 = vshll.u32 %v1422, 16
      %v1468 = vrot.slane %v1466, 5
      %v1469 = vor.u32 %v1465, %v1468
      %v1470 = vrot.slane %v1469, 4
      %v1472 = vshll.u32 %v1423, 16
      %v1474 = vrot.slane %v1472, 5
      %v1475 = vsel %vm505, %v1470, %v1474
      %v1477 = vshrl.u32 %v1424, 16
      %v1479 = vrot.slane %v1477, 4
      %v1480 = vshll.u32 %v1424, 16
      %v1482 = vrot.slane %v1480, 5
      %v1483 = vor.u32 %v1479, %v1482
      %v1484 = vrot.slane %v1483, 4
      %v1486 = vshll.u32 %v1425, 16
      %v1488 = vrot.slane %v1486, 5
      %v1489 = vsel %vm505, %v1484, %v1488
      %v1491 = vshrl.u32 %v1426, 16
      %v1493 = vrot.slane %v1491, 4
      %v1494 = vshll.u32 %v1426, 16
      %v1496 = vrot.slane %v1494, 5
      %v1497 = vor.u32 %v1493, %v1496
      %v1498 = vrot.slane %v1497, 4
      %v1500 = vshll.u32 %v1427, 16
      %v1502 = vrot.slane %v1500, 5
      %v1503 = vsel %vm505, %v1498, %v1502
      %v1505 = vshrl.u32 %v1428, 16
      %v1507 = vrot.slane %v1505, 4
      %v1508 = vshll.u32 %v1428, 16
      %v1510 = vrot.slane %v1508, 5
      %v1511 = vor.u32 %v1507, %v1510
      %v1512 = vrot.slane %v1511, 4
      %v1514 = vshll.u32 %v1429, 16
      %v1516 = vrot.slane %v1514, 5
      %v1517 = vsel %vm505, %v1512, %v1516
      %v1519 = vshrl.u32 %v1430, 16
      %v1521 = vrot.slane %v1519, 4
      %v1522 = vshll.u32 %v1430, 16
      %v1524 = vrot.slane %v1522, 5
      %v1525 = vor.u32 %v1521, %v1524
      %v1526 = vrot.slane %v1525, 4
      %v1528 = vshll.u32 %v1431, 16
      %v1530 = vrot.slane %v1528, 5
      %v1531 = vsel %vm505, %v1526, %v1530
      %v1533 = vshrl.u32 %v1432, 16
      %v1535 = vrot.slane %v1533, 4
      %v1536 = vshll.u32 %v1432, 16
      %v1538 = vrot.slane %v1536, 5
      %v1539 = vor.u32 %v1535, %v1538
      %v1540 = vrot.slane %v1539, 4
      %v1542 = vshll.u32 %v1433, 16
      %v1544 = vrot.slane %v1542, 5
      %v1545 = vsel %vm505, %v1540, %v1544
      %s1546 = scalar_lea.vmem %s247, 14
      %v1547 = vld [vmem:[%s1546] sm:$0x3]
      %v1548 = vunpack.c.l.b16 %v1447
      %v1549 = vunpack.c.l.b16 %v1461
      %v1550 = vunpack.c.l.b16 %v1475
      %v1551 = vunpack.c.l.b16 %v1489
      %v1552 = vunpack.c.l.b16 %v1503
      %v1553 = vunpack.c.l.b16 %v1517
      %v1554 = vunpack.c.l.b16 %v1531
      %v1555 = vunpack.c.l.b16 %v1545
      %v1556 = vpack.c.b16 %v1549, %v1548
      %v1557 = vpack.c.b16 %v1551, %v1550
      %v1558 = vpack.c.b16 %v1553, %v1552
      %v1559 = vpack.c.b16 %v1555, %v1554
      %v1561 = vsel %vm305, %v1556, 0
      %v1564 = vsel %vm305, %v1557, 0
      %v1567 = vsel %vm305, %v1558, 0
      %v1570 = vsel %vm305, %v1559, 0
      %v1573 = vsel %vm318, %v1547, 0
      %1575 = vmatprep.subr.bf16.mxu0 0
      %1576 = vmatpush1.bf16.msra.mxu0 0
      %1577 = vmatprep.subr.bf16.mxu0 0
      %1578 = vmatpush1.bf16.msra.mxu0 0
      %1579 = vmatprep.subr.bf16.mxu0 0
      %1580 = vmatpush1.bf16.msra.mxu0 0
      %1581 = vmatprep.subr.bf16.mxu0 0
      %1582 = vmatpush1.bf16.msra.mxu0 0
      %1583 = vmatprep.subr.bf16.mxu0 0
      %1584 = vmatpush1.bf16.msra.mxu0 0
      %1585 = vmatprep.subr.bf16.mxu0 0
      %1586 = vmatpush1.bf16.msra.mxu0 0
      %1587 = vmatprep.subr.bf16.mxu0 0
      %1588 = vmatpush1.bf16.msra.mxu0 0
      %1589 = vmatprep.subr.bf16.mxu0 0
      %1590 = vmatpush1.bf16.msra.mxu0 %v1573
      %1591 = vmatprep.subr.bf16.mxu0 0
      %1592 = vmatpush2.bf16.msra.mxu0 0
      %1593 = vmatprep.subr.bf16.mxu0 0
      %1594 = vmatpush2.bf16.msra.mxu0 0
      %1595 = vmatprep.subr.bf16.mxu0 0
      %1596 = vmatpush2.bf16.msra.mxu0 0
      %1597 = vmatprep.subr.bf16.mxu0 0
      %1598 = vmatpush2.bf16.msra.mxu0 0
      %1599 = vmatprep.subr.bf16.mxu0 0
      %1600 = vmatpush2.bf16.msra.mxu0 0
      %1601 = vmatprep.subr.bf16.mxu0 0
      %1602 = vmatpush2.bf16.msra.mxu0 0
      %1603 = vmatprep.subr.bf16.mxu0 0
      %1604 = vmatpush2.bf16.msra.mxu0 0
      %1605 = vmatprep.subr.bf16.mxu0 0
      %1606 = vmatpush2.bf16.msra.mxu0 0
      %1607 = vmatprep.mubr.bf16.mxu0 0
      %1608 = vmatmul.mubr.bf16.gmra.mxu0 %v1561
      %v1609 = vpop.f32.mrf.mxu0
      %v1610 = vadd.f32 0.0, %v1609
      %v1611 = vpop.f32.mrf.mxu0
      %v1612 = vpop.f32.mrf.mxu0
      %v1613 = vadd.f32 0.0, %v1612
      %v1614 = vpop.f32.mrf.mxu0
      %1615 = vmatprep.mubr.bf16.mxu0 0
      %1616 = vmatmul.mubr.bf16.gmra.mxu0 %v1564
      %v1617 = vpop.f32.mrf.mxu0
      %v1618 = vadd.f32 0.0, %v1617
      %v1619 = vpop.f32.mrf.mxu0
      %v1620 = vpop.f32.mrf.mxu0
      %v1621 = vadd.f32 0.0, %v1620
      %v1622 = vpop.f32.mrf.mxu0
      %1623 = vmatprep.mubr.bf16.mxu0 0
      %1624 = vmatmul.mubr.bf16.gmra.mxu0 %v1567
      %v1625 = vpop.f32.mrf.mxu0
      %v1626 = vadd.f32 0.0, %v1625
      %v1627 = vpop.f32.mrf.mxu0
      %v1628 = vpop.f32.mrf.mxu0
      %v1629 = vadd.f32 0.0, %v1628
      %v1630 = vpop.f32.mrf.mxu0
      %1631 = vmatprep.mubr.bf16.mxu0 0
      %1632 = vmatmul.mubr.bf16.gmra.mxu0 %v1570
      %v1633 = vpop.f32.mrf.mxu0
      %v1634 = vadd.f32 0.0, %v1633
      %v1635 = vpop.f32.mrf.mxu0
      %v1636 = vpop.f32.mrf.mxu0
      %v1637 = vadd.f32 0.0, %v1636
      %v1638 = vpop.f32.mrf.mxu0
      %1639 = vdwg.mxu0
      %v1640 = vadd.f32 %v1410, %v1610
      %v1641 = vadd.f32 %v1411, %v1613
      %v1642 = vadd.f32 %v1412, %v1618
      %v1643 = vadd.f32 %v1413, %v1621
      %v1644 = vadd.f32 %v1414, %v1626
      %v1645 = vadd.f32 %v1415, %v1629
      %v1646 = vadd.f32 %v1416, %v1634
      %v1647 = vadd.f32 %v1417, %v1637
      %s1648 = scalar_lea.vmem %s241, 256
      %v1649 = vld [vmem:[%s1648] sm:$0xf]
      %v1650 = vld [vmem:[%s1648 + $0x8] sm:$0xf]
      %v1651 = vld [vmem:[%s1648 + $0x10] sm:$0xf]
      %v1652 = vld [vmem:[%s1648 + $0x18] sm:$0xf]
      %v1653 = vld [vmem:[%s1648 + $0x20] sm:$0xf]
      %v1654 = vld [vmem:[%s1648 + $0x28] sm:$0xf]
      %v1655 = vld [vmem:[%s1648 + $0x30] sm:$0xf]
      %v1656 = vld [vmem:[%s1648 + $0x38] sm:$0xf]
      %s1657 = scalar_lea.vmem %s247, 16
      %v1658 = vld [vmem:[%s1657] sm:$0x3]
      %v1667 = vunpack.c.l.b16 %v1649
      %v1668 = vunpack.c.l.b16 %v1650
      %v1669 = vunpack.c.l.b16 %v1651
      %v1670 = vunpack.c.l.b16 %v1652
      %v1671 = vunpack.c.l.b16 %v1653
      %v1672 = vunpack.c.l.b16 %v1654
      %v1673 = vunpack.c.l.b16 %v1655
      %v1674 = vunpack.c.l.b16 %v1656
      %v1675 = vpack.c.b16 %v1668, %v1667
      %v1676 = vpack.c.b16 %v1670, %v1669
      %v1677 = vpack.c.b16 %v1672, %v1671
      %v1678 = vpack.c.b16 %v1674, %v1673
      %v1680 = vsel %vm305, %v1675, 0
      %v1683 = vsel %vm305, %v1676, 0
      %v1686 = vsel %vm305, %v1677, 0
      %v1689 = vsel %vm305, %v1678, 0
      %v1692 = vsel %vm318, %v1658, 0
      %1694 = vmatprep.subr.bf16.mxu0 0
      %1695 = vmatpush1.bf16.msra.mxu0 0
      %1696 = vmatprep.subr.bf16.mxu0 0
      %1697 = vmatpush1.bf16.msra.mxu0 0
      %1698 = vmatprep.subr.bf16.mxu0 0
      %1699 = vmatpush1.bf16.msra.mxu0 0
      %1700 = vmatprep.subr.bf16.mxu0 0
      %1701 = vmatpush1.bf16.msra.mxu0 0
      %1702 = vmatprep.subr.bf16.mxu0 0
      %1703 = vmatpush1.bf16.msra.mxu0 0
      %1704 = vmatprep.subr.bf16.mxu0 0
      %1705 = vmatpush1.bf16.msra.mxu0 0
      %1706 = vmatprep.subr.bf16.mxu0 0
      %1707 = vmatpush1.bf16.msra.mxu0 0
      %1708 = vmatprep.subr.bf16.mxu0 0
      %1709 = vmatpush1.bf16.msra.mxu0 %v1692
      %1710 = vmatprep.subr.bf16.mxu0 0
      %1711 = vmatpush2.bf16.msra.mxu0 0
      %1712 = vmatprep.subr.bf16.mxu0 0
      %1713 = vmatpush2.bf16.msra.mxu0 0
      %1714 = vmatprep.subr.bf16.mxu0 0
      %1715 = vmatpush2.bf16.msra.mxu0 0
      %1716 = vmatprep.subr.bf16.mxu0 0
      %1717 = vmatpush2.bf16.msra.mxu0 0
      %1718 = vmatprep.subr.bf16.mxu0 0
      %1719 = vmatpush2.bf16.msra.mxu0 0
      %1720 = vmatprep.subr.bf16.mxu0 0
      %1721 = vmatpush2.bf16.msra.mxu0 0
      %1722 = vmatprep.subr.bf16.mxu0 0
      %1723 = vmatpush2.bf16.msra.mxu0 0
      %1724 = vmatprep.subr.bf16.mxu0 0
      %1725 = vmatpush2.bf16.msra.mxu0 0
      %1726 = vmatprep.mubr.bf16.mxu0 0
      %1727 = vmatmul.mubr.bf16.gmra.mxu0 %v1680
      %v1728 = vpop.f32.mrf.mxu0
      %v1729 = vadd.f32 0.0, %v1728
      %v1730 = vpop.f32.mrf.mxu0
      %v1731 = vpop.f32.mrf.mxu0
      %v1732 = vadd.f32 0.0, %v1731
      %v1733 = vpop.f32.mrf.mxu0
      %1734 = vmatprep.mubr.bf16.mxu0 0
      %1735 = vmatmul.mubr.bf16.gmra.mxu0 %v1683
      %v1736 = vpop.f32.mrf.mxu0
      %v1737 = vadd.f32 0.0, %v1736
      %v1738 = vpop.f32.mrf.mxu0
      %v1739 = vpop.f32.mrf.mxu0
      %v1740 = vadd.f32 0.0, %v1739
      %v1741 = vpop.f32.mrf.mxu0
      %1742 = vmatprep.mubr.bf16.mxu0 0
      %1743 = vmatmul.mubr.bf16.gmra.mxu0 %v1686
      %v1744 = vpop.f32.mrf.mxu0
      %v1745 = vadd.f32 0.0, %v1744
      %v1746 = vpop.f32.mrf.mxu0
      %v1747 = vpop.f32.mrf.mxu0
      %v1748 = vadd.f32 0.0, %v1747
      %v1749 = vpop.f32.mrf.mxu0
      %1750 = vmatprep.mubr.bf16.mxu0 0
      %1751 = vmatmul.mubr.bf16.gmra.mxu0 %v1689
      %v1752 = vpop.f32.mrf.mxu0
      %v1753 = vadd.f32 0.0, %v1752
      %v1754 = vpop.f32.mrf.mxu0
      %v1755 = vpop.f32.mrf.mxu0
      %v1756 = vadd.f32 0.0, %v1755
      %v1757 = vpop.f32.mrf.mxu0
      %1758 = vdwg.mxu0
      %v1759 = vadd.f32 %v1640, %v1729
      %v1760 = vadd.f32 %v1641, %v1732
      %v1761 = vadd.f32 %v1642, %v1737
      %v1762 = vadd.f32 %v1643, %v1740
      %v1763 = vadd.f32 %v1644, %v1745
      %v1764 = vadd.f32 %v1645, %v1748
      %v1765 = vadd.f32 %v1646, %v1753
      %v1766 = vadd.f32 %v1647, %v1756
      %s1767 = scalar_lea.vmem %s241, 320
      %v1768 = vld [vmem:[%s1767] sm:$0xf]
      %v1769 = vld [vmem:[%s1767 + $0x8] sm:$0xf]
      %v1770 = vld [vmem:[%s1767 + $0x10] sm:$0xf]
      %v1771 = vld [vmem:[%s1767 + $0x18] sm:$0xf]
      %v1772 = vld [vmem:[%s1767 + $0x20] sm:$0xf]
      %v1773 = vld [vmem:[%s1767 + $0x28] sm:$0xf]
      %v1774 = vld [vmem:[%s1767 + $0x30] sm:$0xf]
      %v1775 = vld [vmem:[%s1767 + $0x38] sm:$0xf]
      %s1776 = scalar_lea.vmem %s247, 18
      %v1777 = vld [vmem:[%s1776] sm:$0x3]
      %v1786 = vunpack.c.l.b16 %v1768
      %v1787 = vunpack.c.l.b16 %v1769
      %v1788 = vunpack.c.l.b16 %v1770
      %v1789 = vunpack.c.l.b16 %v1771
      %v1790 = vunpack.c.l.b16 %v1772
      %v1791 = vunpack.c.l.b16 %v1773
      %v1792 = vunpack.c.l.b16 %v1774
      %v1793 = vunpack.c.l.b16 %v1775
      %v1794 = vpack.c.b16 %v1787, %v1786
      %v1795 = vpack.c.b16 %v1789, %v1788
      %v1796 = vpack.c.b16 %v1791, %v1790
      %v1797 = vpack.c.b16 %v1793, %v1792
      %v1799 = vsel %vm305, %v1794, 0
      %v1802 = vsel %vm305, %v1795, 0
      %v1805 = vsel %vm305, %v1796, 0
      %v1808 = vsel %vm305, %v1797, 0
      %v1811 = vsel %vm318, %v1777, 0
      %1813 = vmatprep.subr.bf16.mxu0 0
      %1814 = vmatpush1.bf16.msra.mxu0 0
      %1815 = vmatprep.subr.bf16.mxu0 0
      %1816 = vmatpush1.bf16.msra.mxu0 0
      %1817 = vmatprep.subr.bf16.mxu0 0
      %1818 = vmatpush1.bf16.msra.mxu0 0
      %1819 = vmatprep.subr.bf16.mxu0 0
      %1820 = vmatpush1.bf16.msra.mxu0 0
      %1821 = vmatprep.subr.bf16.mxu0 0
      %1822 = vmatpush1.bf16.msra.mxu0 0
      %1823 = vmatprep.subr.bf16.mxu0 0
      %1824 = vmatpush1.bf16.msra.mxu0 0
      %1825 = vmatprep.subr.bf16.mxu0 0
      %1826 = vmatpush1.bf16.msra.mxu0 0
      %1827 = vmatprep.subr.bf16.mxu0 0
      %1828 = vmatpush1.bf16.msra.mxu0 %v1811
      %1829 = vmatprep.subr.bf16.mxu0 0
      %1830 = vmatpush2.bf16.msra.mxu0 0
      %1831 = vmatprep.subr.bf16.mxu0 0
      %1832 = vmatpush2.bf16.msra.mxu0 0
      %1833 = vmatprep.subr.bf16.mxu0 0
      %1834 = vmatpush2.bf16.msra.mxu0 0
      %1835 = vmatprep.subr.bf16.mxu0 0
      %1836 = vmatpush2.bf16.msra.mxu0 0
      %1837 = vmatprep.subr.bf16.mxu0 0
      %1838 = vmatpush2.bf16.msra.mxu0 0
      %1839 = vmatprep.subr.bf16.mxu0 0
      %1840 = vmatpush2.bf16.msra.mxu0 0
      %1841 = vmatprep.subr.bf16.mxu0 0
      %1842 = vmatpush2.bf16.msra.mxu0 0
      %1843 = vmatprep.subr.bf16.mxu0 0
      %1844 = vmatpush2.bf16.msra.mxu0 0
      %1845 = vmatprep.mubr.bf16.mxu0 0
      %1846 = vmatmul.mubr.bf16.gmra.mxu0 %v1799
      %v1847 = vpop.f32.mrf.mxu0
      %v1848 = vadd.f32 0.0, %v1847
      %v1849 = vpop.f32.mrf.mxu0
      %v1850 = vpop.f32.mrf.mxu0
      %v1851 = vadd.f32 0.0, %v1850
      %v1852 = vpop.f32.mrf.mxu0
      %1853 = vmatprep.mubr.bf16.mxu0 0
      %1854 = vmatmul.mubr.bf16.gmra.mxu0 %v1802
      %v1855 = vpop.f32.mrf.mxu0
      %v1856 = vadd.f32 0.0, %v1855
      %v1857 = vpop.f32.mrf.mxu0
      %v1858 = vpop.f32.mrf.mxu0
      %v1859 = vadd.f32 0.0, %v1858
      %v1860 = vpop.f32.mrf.mxu0
      %1861 = vmatprep.mubr.bf16.mxu0 0
      %1862 = vmatmul.mubr.bf16.gmra.mxu0 %v1805
      %v1863 = vpop.f32.mrf.mxu0
      %v1864 = vadd.f32 0.0, %v1863
      %v1865 = vpop.f32.mrf.mxu0
      %v1866 = vpop.f32.mrf.mxu0
      %v1867 = vadd.f32 0.0, %v1866
      %v1868 = vpop.f32.mrf.mxu0
      %1869 = vmatprep.mubr.bf16.mxu0 0
      %1870 = vmatmul.mubr.bf16.gmra.mxu0 %v1808
      %v1871 = vpop.f32.mrf.mxu0
      %v1872 = vadd.f32 0.0, %v1871
      %v1873 = vpop.f32.mrf.mxu0
      %v1874 = vpop.f32.mrf.mxu0
      %v1875 = vadd.f32 0.0, %v1874
      %v1876 = vpop.f32.mrf.mxu0
      %1877 = vdwg.mxu0
      %v1878 = vadd.f32 %v1759, %v1848
      %v1879 = vadd.f32 %v1760, %v1851
      %v1880 = vadd.f32 %v1761, %v1856
      %v1881 = vadd.f32 %v1762, %v1859
      %v1882 = vadd.f32 %v1763, %v1864
      %v1883 = vadd.f32 %v1764, %v1867
      %v1884 = vadd.f32 %v1765, %v1872
      %v1885 = vadd.f32 %v1766, %v1875
      %v1886 = vld [vmem:[%s1648] sm:$0xf]
      %v1887 = vld [vmem:[%s1648 + $0x4] sm:$0x1]
      %v1888 = vld [vmem:[%s1648 + $0x8] sm:$0xf]
      %v1889 = vld [vmem:[%s1648 + $0xc] sm:$0x1]
      %v1890 = vld [vmem:[%s1648 + $0x10] sm:$0xf]
      %v1891 = vld [vmem:[%s1648 + $0x14] sm:$0x1]
      %v1892 = vld [vmem:[%s1648 + $0x18] sm:$0xf]
      %v1893 = vld [vmem:[%s1648 + $0x1c] sm:$0x1]
      %v1894 = vld [vmem:[%s1648 + $0x20] sm:$0xf]
      %v1895 = vld [vmem:[%s1648 + $0x24] sm:$0x1]
      %v1896 = vld [vmem:[%s1648 + $0x28] sm:$0xf]
      %v1897 = vld [vmem:[%s1648 + $0x2c] sm:$0x1]
      %v1898 = vld [vmem:[%s1648 + $0x30] sm:$0xf]
      %v1899 = vld [vmem:[%s1648 + $0x34] sm:$0x1]
      %v1900 = vld [vmem:[%s1648 + $0x38] sm:$0xf]
      %v1901 = vld [vmem:[%s1648 + $0x3c] sm:$0x1]
      %v1903 = vshrl.u32 %v1886, 16
      %v1905 = vrot.slane %v1903, 4
      %v1906 = vshll.u32 %v1886, 16
      %v1908 = vrot.slane %v1906, 5
      %v1909 = vor.u32 %v1905, %v1908
      %v1910 = vrot.slane %v1909, 4
      %v1912 = vshll.u32 %v1887, 16
      %v1914 = vrot.slane %v1912, 5
      %v1915 = vsel %vm505, %v1910, %v1914
      %v1917 = vshrl.u32 %v1888, 16
      %v1919 = vrot.slane %v1917, 4
      %v1920 = vshll.u32 %v1888, 16
      %v1922 = vrot.slane %v1920, 5
      %v1923 = vor.u32 %v1919, %v1922
      %v1924 = vrot.slane %v1923, 4
      %v1926 = vshll.u32 %v1889, 16
      %v1928 = vrot.slane %v1926, 5
      %v1929 = vsel %vm505, %v1924, %v1928
      %v1931 = vshrl.u32 %v1890, 16
      %v1933 = vrot.slane %v1931, 4
      %v1934 = vshll.u32 %v1890, 16
      %v1936 = vrot.slane %v1934, 5
      %v1937 = vor.u32 %v1933, %v1936
      %v1938 = vrot.slane %v1937, 4
      %v1940 = vshll.u32 %v1891, 16
      %v1942 = vrot.slane %v1940, 5
      %v1943 = vsel %vm505, %v1938, %v1942
      %v1945 = vshrl.u32 %v1892, 16
      %v1947 = vrot.slane %v1945, 4
      %v1948 = vshll.u32 %v1892, 16
      %v1950 = vrot.slane %v1948, 5
      %v1951 = vor.u32 %v1947, %v1950
      %v1952 = vrot.slane %v1951, 4
      %v1954 = vshll.u32 %v1893, 16
      %v1956 = vrot.slane %v1954, 5
      %v1957 = vsel %vm505, %v1952, %v1956
      %v1959 = vshrl.u32 %v1894, 16
      %v1961 = vrot.slane %v1959, 4
      %v1962 = vshll.u32 %v1894, 16
      %v1964 = vrot.slane %v1962, 5
      %v1965 = vor.u32 %v1961, %v1964
      %v1966 = vrot.slane %v1965, 4
      %v1968 = vshll.u32 %v1895, 16
      %v1970 = vrot.slane %v1968, 5
      %v1971 = vsel %vm505, %v1966, %v1970
      %v1973 = vshrl.u32 %v1896, 16
      %v1975 = vrot.slane %v1973, 4
      %v1976 = vshll.u32 %v1896, 16
      %v1978 = vrot.slane %v1976, 5
      %v1979 = vor.u32 %v1975, %v1978
      %v1980 = vrot.slane %v1979, 4
      %v1982 = vshll.u32 %v1897, 16
      %v1984 = vrot.slane %v1982, 5
      %v1985 = vsel %vm505, %v1980, %v1984
      %v1987 = vshrl.u32 %v1898, 16
      %v1989 = vrot.slane %v1987, 4
      %v1990 = vshll.u32 %v1898, 16
      %v1992 = vrot.slane %v1990, 5
      %v1993 = vor.u32 %v1989, %v1992
      %v1994 = vrot.slane %v1993, 4
      %v1996 = vshll.u32 %v1899, 16
      %v1998 = vrot.slane %v1996, 5
      %v1999 = vsel %vm505, %v1994, %v1998
      %v2001 = vshrl.u32 %v1900, 16
      %v2003 = vrot.slane %v2001, 4
      %v2004 = vshll.u32 %v1900, 16
      %v2006 = vrot.slane %v2004, 5
      %v2007 = vor.u32 %v2003, %v2006
      %v2008 = vrot.slane %v2007, 4
      %v2010 = vshll.u32 %v1901, 16
      %v2012 = vrot.slane %v2010, 5
      %v2013 = vsel %vm505, %v2008, %v2012
      %s2014 = scalar_lea.vmem %s247, 20
      %v2015 = vld [vmem:[%s2014] sm:$0x3]
      %v2016 = vunpack.c.l.b16 %v1915
      %v2017 = vunpack.c.l.b16 %v1929
      %v2018 = vunpack.c.l.b16 %v1943
      %v2019 = vunpack.c.l.b16 %v1957
      %v2020 = vunpack.c.l.b16 %v1971
      %v2021 = vunpack.c.l.b16 %v1985
      %v2022 = vunpack.c.l.b16 %v1999
      %v2023 = vunpack.c.l.b16 %v2013
      %v2024 = vpack.c.b16 %v2017, %v2016
      %v2025 = vpack.c.b16 %v2019, %v2018
      %v2026 = vpack.c.b16 %v2021, %v2020
      %v2027 = vpack.c.b16 %v2023, %v2022
      %v2029 = vsel %vm305, %v2024, 0
      %v2032 = vsel %vm305, %v2025, 0
      %v2035 = vsel %vm305, %v2026, 0
      %v2038 = vsel %vm305, %v2027, 0
      %v2041 = vsel %vm318, %v2015, 0
      %2043 = vmatprep.subr.bf16.mxu0 0
      %2044 = vmatpush1.bf16.msra.mxu0 0
      %2045 = vmatprep.subr.bf16.mxu0 0
      %2046 = vmatpush1.bf16.msra.mxu0 0
      %2047 = vmatprep.subr.bf16.mxu0 0
      %2048 = vmatpush1.bf16.msra.mxu0 0
      %2049 = vmatprep.subr.bf16.mxu0 0
      %2050 = vmatpush1.bf16.msra.mxu0 0
      %2051 = vmatprep.subr.bf16.mxu0 0
      %2052 = vmatpush1.bf16.msra.mxu0 0
      %2053 = vmatprep.subr.bf16.mxu0 0
      %2054 = vmatpush1.bf16.msra.mxu0 0
      %2055 = vmatprep.subr.bf16.mxu0 0
      %2056 = vmatpush1.bf16.msra.mxu0 0
      %2057 = vmatprep.subr.bf16.mxu0 0
      %2058 = vmatpush1.bf16.msra.mxu0 %v2041
      %2059 = vmatprep.subr.bf16.mxu0 0
      %2060 = vmatpush2.bf16.msra.mxu0 0
      %2061 = vmatprep.subr.bf16.mxu0 0
      %2062 = vmatpush2.bf16.msra.mxu0 0
      %2063 = vmatprep.subr.bf16.mxu0 0
      %2064 = vmatpush2.bf16.msra.mxu0 0
      %2065 = vmatprep.subr.bf16.mxu0 0
      %2066 = vmatpush2.bf16.msra.mxu0 0
      %2067 = vmatprep.subr.bf16.mxu0 0
      %2068 = vmatpush2.bf16.msra.mxu0 0
      %2069 = vmatprep.subr.bf16.mxu0 0
      %2070 = vmatpush2.bf16.msra.mxu0 0
      %2071 = vmatprep.subr.bf16.mxu0 0
      %2072 = vmatpush2.bf16.msra.mxu0 0
      %2073 = vmatprep.subr.bf16.mxu0 0
      %2074 = vmatpush2.bf16.msra.mxu0 0
      %2075 = vmatprep.mubr.bf16.mxu0 0
      %2076 = vmatmul.mubr.bf16.gmra.mxu0 %v2029
      %v2077 = vpop.f32.mrf.mxu0
      %v2078 = vadd.f32 0.0, %v2077
      %v2079 = vpop.f32.mrf.mxu0
      %v2080 = vpop.f32.mrf.mxu0
      %v2081 = vadd.f32 0.0, %v2080
      %v2082 = vpop.f32.mrf.mxu0
      %2083 = vmatprep.mubr.bf16.mxu0 0
      %2084 = vmatmul.mubr.bf16.gmra.mxu0 %v2032
      %v2085 = vpop.f32.mrf.mxu0
      %v2086 = vadd.f32 0.0, %v2085
      %v2087 = vpop.f32.mrf.mxu0
      %v2088 = vpop.f32.mrf.mxu0
      %v2089 = vadd.f32 0.0, %v2088
      %v2090 = vpop.f32.mrf.mxu0
      %2091 = vmatprep.mubr.bf16.mxu0 0
      %2092 = vmatmul.mubr.bf16.gmra.mxu0 %v2035
      %v2093 = vpop.f32.mrf.mxu0
      %v2094 = vadd.f32 0.0, %v2093
      %v2095 = vpop.f32.mrf.mxu0
      %v2096 = vpop.f32.mrf.mxu0
      %v2097 = vadd.f32 0.0, %v2096
      %v2098 = vpop.f32.mrf.mxu0
      %2099 = vmatprep.mubr.bf16.mxu0 0
      %2100 = vmatmul.mubr.bf16.gmra.mxu0 %v2038
      %v2101 = vpop.f32.mrf.mxu0
      %v2102 = vadd.f32 0.0, %v2101
      %v2103 = vpop.f32.mrf.mxu0
      %v2104 = vpop.f32.mrf.mxu0
      %v2105 = vadd.f32 0.0, %v2104
      %v2106 = vpop.f32.mrf.mxu0
      %2107 = vdwg.mxu0
      %v2108 = vadd.f32 %v1878, %v2078
      %v2109 = vadd.f32 %v1879, %v2081
      %v2110 = vadd.f32 %v1880, %v2086
      %v2111 = vadd.f32 %v1881, %v2089
      %v2112 = vadd.f32 %v1882, %v2094
      %v2113 = vadd.f32 %v1883, %v2097
      %v2114 = vadd.f32 %v1884, %v2102
      %v2115 = vadd.f32 %v1885, %v2105
      %v2116 = vld [vmem:[%s1767] sm:$0xf]
      %v2117 = vld [vmem:[%s1767 + $0x4] sm:$0x1]
      %v2118 = vld [vmem:[%s1767 + $0x8] sm:$0xf]
      %v2119 = vld [vmem:[%s1767 + $0xc] sm:$0x1]
      %v2120 = vld [vmem:[%s1767 + $0x10] sm:$0xf]
      %v2121 = vld [vmem:[%s1767 + $0x14] sm:$0x1]
      %v2122 = vld [vmem:[%s1767 + $0x18] sm:$0xf]
      %v2123 = vld [vmem:[%s1767 + $0x1c] sm:$0x1]
      %v2124 = vld [vmem:[%s1767 + $0x20] sm:$0xf]
      %v2125 = vld [vmem:[%s1767 + $0x24] sm:$0x1]
      %v2126 = vld [vmem:[%s1767 + $0x28] sm:$0xf]
      %v2127 = vld [vmem:[%s1767 + $0x2c] sm:$0x1]
      %v2128 = vld [vmem:[%s1767 + $0x30] sm:$0xf]
      %v2129 = vld [vmem:[%s1767 + $0x34] sm:$0x1]
      %v2130 = vld [vmem:[%s1767 + $0x38] sm:$0xf]
      %v2131 = vld [vmem:[%s1767 + $0x3c] sm:$0x1]
      %v2133 = vshrl.u32 %v2116, 16
      %v2135 = vrot.slane %v2133, 4
      %v2136 = vshll.u32 %v2116, 16
      %v2138 = vrot.slane %v2136, 5
      %v2139 = vor.u32 %v2135, %v2138
      %v2140 = vrot.slane %v2139, 4
      %v2142 = vshll.u32 %v2117, 16
      %v2144 = vrot.slane %v2142, 5
      %v2145 = vsel %vm505, %v2140, %v2144
      %v2147 = vshrl.u32 %v2118, 16
      %v2149 = vrot.slane %v2147, 4
      %v2150 = vshll.u32 %v2118, 16
      %v2152 = vrot.slane %v2150, 5
      %v2153 = vor.u32 %v2149, %v2152
      %v2154 = vrot.slane %v2153, 4
      %v2156 = vshll.u32 %v2119, 16
      %v2158 = vrot.slane %v2156, 5
      %v2159 = vsel %vm505, %v2154, %v2158
      %v2161 = vshrl.u32 %v2120, 16
      %v2163 = vrot.slane %v2161, 4
      %v2164 = vshll.u32 %v2120, 16
      %v2166 = vrot.slane %v2164, 5
      %v2167 = vor.u32 %v2163, %v2166
      %v2168 = vrot.slane %v2167, 4
      %v2170 = vshll.u32 %v2121, 16
      %v2172 = vrot.slane %v2170, 5
      %v2173 = vsel %vm505, %v2168, %v2172
      %v2175 = vshrl.u32 %v2122, 16
      %v2177 = vrot.slane %v2175, 4
      %v2178 = vshll.u32 %v2122, 16
      %v2180 = vrot.slane %v2178, 5
      %v2181 = vor.u32 %v2177, %v2180
      %v2182 = vrot.slane %v2181, 4
      %v2184 = vshll.u32 %v2123, 16
      %v2186 = vrot.slane %v2184, 5
      %v2187 = vsel %vm505, %v2182, %v2186
      %v2189 = vshrl.u32 %v2124, 16
      %v2191 = vrot.slane %v2189, 4
      %v2192 = vshll.u32 %v2124, 16
      %v2194 = vrot.slane %v2192, 5
      %v2195 = vor.u32 %v2191, %v2194
      %v2196 = vrot.slane %v2195, 4
      %v2198 = vshll.u32 %v2125, 16
      %v2200 = vrot.slane %v2198, 5
      %v2201 = vsel %vm505, %v2196, %v2200
      %v2203 = vshrl.u32 %v2126, 16
      %v2205 = vrot.slane %v2203, 4
      %v2206 = vshll.u32 %v2126, 16
      %v2208 = vrot.slane %v2206, 5
      %v2209 = vor.u32 %v2205, %v2208
      %v2210 = vrot.slane %v2209, 4
      %v2212 = vshll.u32 %v2127, 16
      %v2214 = vrot.slane %v2212, 5
      %v2215 = vsel %vm505, %v2210, %v2214
      %v2217 = vshrl.u32 %v2128, 16
      %v2219 = vrot.slane %v2217, 4
      %v2220 = vshll.u32 %v2128, 16
      %v2222 = vrot.slane %v2220, 5
      %v2223 = vor.u32 %v2219, %v2222
      %v2224 = vrot.slane %v2223, 4
      %v2226 = vshll.u32 %v2129, 16
      %v2228 = vrot.slane %v2226, 5
      %v2229 = vsel %vm505, %v2224, %v2228
      %v2231 = vshrl.u32 %v2130, 16
      %v2233 = vrot.slane %v2231, 4
      %v2234 = vshll.u32 %v2130, 16
      %v2236 = vrot.slane %v2234, 5
      %v2237 = vor.u32 %v2233, %v2236
      %v2238 = vrot.slane %v2237, 4
      %v2240 = vshll.u32 %v2131, 16
      %v2242 = vrot.slane %v2240, 5
      %v2243 = vsel %vm505, %v2238, %v2242
      %s2244 = scalar_lea.vmem %s247, 22
      %v2245 = vld [vmem:[%s2244] sm:$0x3]
      %v2246 = vunpack.c.l.b16 %v2145
      %v2247 = vunpack.c.l.b16 %v2159
      %v2248 = vunpack.c.l.b16 %v2173
      %v2249 = vunpack.c.l.b16 %v2187
      %v2250 = vunpack.c.l.b16 %v2201
      %v2251 = vunpack.c.l.b16 %v2215
      %v2252 = vunpack.c.l.b16 %v2229
      %v2253 = vunpack.c.l.b16 %v2243
      %v2254 = vpack.c.b16 %v2247, %v2246
      %v2255 = vpack.c.b16 %v2249, %v2248
      %v2256 = vpack.c.b16 %v2251, %v2250
      %v2257 = vpack.c.b16 %v2253, %v2252
      %v2259 = vsel %vm305, %v2254, 0
      %v2262 = vsel %vm305, %v2255, 0
      %v2265 = vsel %vm305, %v2256, 0
      %v2268 = vsel %vm305, %v2257, 0
      %v2271 = vsel %vm318, %v2245, 0
      %2273 = vmatprep.subr.bf16.mxu0 0
      %2274 = vmatpush1.bf16.msra.mxu0 0
      %2275 = vmatprep.subr.bf16.mxu0 0
      %2276 = vmatpush1.bf16.msra.mxu0 0
      %2277 = vmatprep.subr.bf16.mxu0 0
      %2278 = vmatpush1.bf16.msra.mxu0 0
      %2279 = vmatprep.subr.bf16.mxu0 0
      %2280 = vmatpush1.bf16.msra.mxu0 0
      %2281 = vmatprep.subr.bf16.mxu0 0
      %2282 = vmatpush1.bf16.msra.mxu0 0
      %2283 = vmatprep.subr.bf16.mxu0 0
      %2284 = vmatpush1.bf16.msra.mxu0 0
      %2285 = vmatprep.subr.bf16.mxu0 0
      %2286 = vmatpush1.bf16.msra.mxu0 0
      %2287 = vmatprep.subr.bf16.mxu0 0
      %2288 = vmatpush1.bf16.msra.mxu0 %v2271
      %2289 = vmatprep.subr.bf16.mxu0 0
      %2290 = vmatpush2.bf16.msra.mxu0 0
      %2291 = vmatprep.subr.bf16.mxu0 0
      %2292 = vmatpush2.bf16.msra.mxu0 0
      %2293 = vmatprep.subr.bf16.mxu0 0
      %2294 = vmatpush2.bf16.msra.mxu0 0
      %2295 = vmatprep.subr.bf16.mxu0 0
      %2296 = vmatpush2.bf16.msra.mxu0 0
      %2297 = vmatprep.subr.bf16.mxu0 0
      %2298 = vmatpush2.bf16.msra.mxu0 0
      %2299 = vmatprep.subr.bf16.mxu0 0
      %2300 = vmatpush2.bf16.msra.mxu0 0
      %2301 = vmatprep.subr.bf16.mxu0 0
      %2302 = vmatpush2.bf16.msra.mxu0 0
      %2303 = vmatprep.subr.bf16.mxu0 0
      %2304 = vmatpush2.bf16.msra.mxu0 0
      %2305 = vmatprep.mubr.bf16.mxu0 0
      %2306 = vmatmul.mubr.bf16.gmra.mxu0 %v2259
      %v2307 = vpop.f32.mrf.mxu0
      %v2308 = vadd.f32 0.0, %v2307
      %v2309 = vpop.f32.mrf.mxu0
      %v2310 = vpop.f32.mrf.mxu0
      %v2311 = vadd.f32 0.0, %v2310
      %v2312 = vpop.f32.mrf.mxu0
      %2313 = vmatprep.mubr.bf16.mxu0 0
      %2314 = vmatmul.mubr.bf16.gmra.mxu0 %v2262
      %v2315 = vpop.f32.mrf.mxu0
      %v2316 = vadd.f32 0.0, %v2315
      %v2317 = vpop.f32.mrf.mxu0
      %v2318 = vpop.f32.mrf.mxu0
      %v2319 = vadd.f32 0.0, %v2318
      %v2320 = vpop.f32.mrf.mxu0
      %2321 = vmatprep.mubr.bf16.mxu0 0
      %2322 = vmatmul.mubr.bf16.gmra.mxu0 %v2265
      %v2323 = vpop.f32.mrf.mxu0
      %v2324 = vadd.f32 0.0, %v2323
      %v2325 = vpop.f32.mrf.mxu0
      %v2326 = vpop.f32.mrf.mxu0
      %v2327 = vadd.f32 0.0, %v2326
      %v2328 = vpop.f32.mrf.mxu0
      %2329 = vmatprep.mubr.bf16.mxu0 0
      %2330 = vmatmul.mubr.bf16.gmra.mxu0 %v2268
      %v2331 = vpop.f32.mrf.mxu0
      %v2332 = vadd.f32 0.0, %v2331
      %v2333 = vpop.f32.mrf.mxu0
      %v2334 = vpop.f32.mrf.mxu0
      %v2335 = vadd.f32 0.0, %v2334
      %v2336 = vpop.f32.mrf.mxu0
      %2337 = vdwg.mxu0
      %v2338 = vadd.f32 %v2108, %v2308
      %v2339 = vadd.f32 %v2109, %v2311
      %v2340 = vadd.f32 %v2110, %v2316
      %v2341 = vadd.f32 %v2111, %v2319
      %v2342 = vadd.f32 %v2112, %v2324
      %v2343 = vadd.f32 %v2113, %v2327
      %v2344 = vadd.f32 %v2114, %v2332
      %v2345 = vadd.f32 %v2115, %v2335
      %s2346 = scalar_lea.vmem %s241, 384
      %v2347 = vld [vmem:[%s2346] sm:$0xf]
      %v2348 = vld [vmem:[%s2346 + $0x8] sm:$0xf]
      %v2349 = vld [vmem:[%s2346 + $0x10] sm:$0xf]
      %v2350 = vld [vmem:[%s2346 + $0x18] sm:$0xf]
      %v2351 = vld [vmem:[%s2346 + $0x20] sm:$0xf]
      %v2352 = vld [vmem:[%s2346 + $0x28] sm:$0xf]
      %v2353 = vld [vmem:[%s2346 + $0x30] sm:$0xf]
      %v2354 = vld [vmem:[%s2346 + $0x38] sm:$0xf]
      %s2355 = scalar_lea.vmem %s247, 24
      %v2356 = vld [vmem:[%s2355] sm:$0x3]
      %v2365 = vunpack.c.l.b16 %v2347
      %v2366 = vunpack.c.l.b16 %v2348
      %v2367 = vunpack.c.l.b16 %v2349
      %v2368 = vunpack.c.l.b16 %v2350
      %v2369 = vunpack.c.l.b16 %v2351
      %v2370 = vunpack.c.l.b16 %v2352
      %v2371 = vunpack.c.l.b16 %v2353
      %v2372 = vunpack.c.l.b16 %v2354
      %v2373 = vpack.c.b16 %v2366, %v2365
      %v2374 = vpack.c.b16 %v2368, %v2367
      %v2375 = vpack.c.b16 %v2370, %v2369
      %v2376 = vpack.c.b16 %v2372, %v2371
      %v2378 = vsel %vm305, %v2373, 0
      %v2381 = vsel %vm305, %v2374, 0
      %v2384 = vsel %vm305, %v2375, 0
      %v2387 = vsel %vm305, %v2376, 0
      %v2390 = vsel %vm318, %v2356, 0
      %2392 = vmatprep.subr.bf16.mxu0 0
      %2393 = vmatpush1.bf16.msra.mxu0 0
      %2394 = vmatprep.subr.bf16.mxu0 0
      %2395 = vmatpush1.bf16.msra.mxu0 0
      %2396 = vmatprep.subr.bf16.mxu0 0
      %2397 = vmatpush1.bf16.msra.mxu0 0
      %2398 = vmatprep.subr.bf16.mxu0 0
      %2399 = vmatpush1.bf16.msra.mxu0 0
      %2400 = vmatprep.subr.bf16.mxu0 0
      %2401 = vmatpush1.bf16.msra.mxu0 0
      %2402 = vmatprep.subr.bf16.mxu0 0
      %2403 = vmatpush1.bf16.msra.mxu0 0
      %2404 = vmatprep.subr.bf16.mxu0 0
      %2405 = vmatpush1.bf16.msra.mxu0 0
      %2406 = vmatprep.subr.bf16.mxu0 0
      %2407 = vmatpush1.bf16.msra.mxu0 %v2390
      %2408 = vmatprep.subr.bf16.mxu0 0
      %2409 = vmatpush2.bf16.msra.mxu0 0
      %2410 = vmatprep.subr.bf16.mxu0 0
      %2411 = vmatpush2.bf16.msra.mxu0 0
      %2412 = vmatprep.subr.bf16.mxu0 0
      %2413 = vmatpush2.bf16.msra.mxu0 0
      %2414 = vmatprep.subr.bf16.mxu0 0
      %2415 = vmatpush2.bf16.msra.mxu0 0
      %2416 = vmatprep.subr.bf16.mxu0 0
      %2417 = vmatpush2.bf16.msra.mxu0 0
      %2418 = vmatprep.subr.bf16.mxu0 0
      %2419 = vmatpush2.bf16.msra.mxu0 0
      %2420 = vmatprep.subr.bf16.mxu0 0
      %2421 = vmatpush2.bf16.msra.mxu0 0
      %2422 = vmatprep.subr.bf16.mxu0 0
      %2423 = vmatpush2.bf16.msra.mxu0 0
      %2424 = vmatprep.mubr.bf16.mxu0 0
      %2425 = vmatmul.mubr.bf16.gmra.mxu0 %v2378
      %v2426 = vpop.f32.mrf.mxu0
      %v2427 = vadd.f32 0.0, %v2426
      %v2428 = vpop.f32.mrf.mxu0
      %v2429 = vpop.f32.mrf.mxu0
      %v2430 = vadd.f32 0.0, %v2429
      %v2431 = vpop.f32.mrf.mxu0
      %2432 = vmatprep.mubr.bf16.mxu0 0
      %2433 = vmatmul.mubr.bf16.gmra.mxu0 %v2381
      %v2434 = vpop.f32.mrf.mxu0
      %v2435 = vadd.f32 0.0, %v2434
      %v2436 = vpop.f32.mrf.mxu0
      %v2437 = vpop.f32.mrf.mxu0
      %v2438 = vadd.f32 0.0, %v2437
      %v2439 = vpop.f32.mrf.mxu0
      %2440 = vmatprep.mubr.bf16.mxu0 0
      %2441 = vmatmul.mubr.bf16.gmra.mxu0 %v2384
      %v2442 = vpop.f32.mrf.mxu0
      %v2443 = vadd.f32 0.0, %v2442
      %v2444 = vpop.f32.mrf.mxu0
      %v2445 = vpop.f32.mrf.mxu0
      %v2446 = vadd.f32 0.0, %v2445
      %v2447 = vpop.f32.mrf.mxu0
      %2448 = vmatprep.mubr.bf16.mxu0 0
      %2449 = vmatmul.mubr.bf16.gmra.mxu0 %v2387
      %v2450 = vpop.f32.mrf.mxu0
      %v2451 = vadd.f32 0.0, %v2450
      %v2452 = vpop.f32.mrf.mxu0
      %v2453 = vpop.f32.mrf.mxu0
      %v2454 = vadd.f32 0.0, %v2453
      %v2455 = vpop.f32.mrf.mxu0
      %2456 = vdwg.mxu0
      %v2457 = vadd.f32 %v2338, %v2427
      %v2458 = vadd.f32 %v2339, %v2430
      %v2459 = vadd.f32 %v2340, %v2435
      %v2460 = vadd.f32 %v2341, %v2438
      %v2461 = vadd.f32 %v2342, %v2443
      %v2462 = vadd.f32 %v2343, %v2446
      %v2463 = vadd.f32 %v2344, %v2451
      %v2464 = vadd.f32 %v2345, %v2454
      %s2465 = scalar_lea.vmem %s241, 448
      %v2466 = vld [vmem:[%s2465] sm:$0xf]
      %v2467 = vld [vmem:[%s2465 + $0x8] sm:$0xf]
      %v2468 = vld [vmem:[%s2465 + $0x10] sm:$0xf]
      %v2469 = vld [vmem:[%s2465 + $0x18] sm:$0xf]
      %v2470 = vld [vmem:[%s2465 + $0x20] sm:$0xf]
      %v2471 = vld [vmem:[%s2465 + $0x28] sm:$0xf]
      %v2472 = vld [vmem:[%s2465 + $0x30] sm:$0xf]
      %v2473 = vld [vmem:[%s2465 + $0x38] sm:$0xf]
      %s2474 = scalar_lea.vmem %s247, 26
      %v2475 = vld [vmem:[%s2474] sm:$0x3]
      %v2484 = vunpack.c.l.b16 %v2466
      %v2485 = vunpack.c.l.b16 %v2467
      %v2486 = vunpack.c.l.b16 %v2468
      %v2487 = vunpack.c.l.b16 %v2469
      %v2488 = vunpack.c.l.b16 %v2470
      %v2489 = vunpack.c.l.b16 %v2471
      %v2490 = vunpack.c.l.b16 %v2472
      %v2491 = vunpack.c.l.b16 %v2473
      %v2492 = vpack.c.b16 %v2485, %v2484
      %v2493 = vpack.c.b16 %v2487, %v2486
      %v2494 = vpack.c.b16 %v2489, %v2488
      %v2495 = vpack.c.b16 %v2491, %v2490
      %v2497 = vsel %vm305, %v2492, 0
      %v2500 = vsel %vm305, %v2493, 0
      %v2503 = vsel %vm305, %v2494, 0
      %v2506 = vsel %vm305, %v2495, 0
      %v2509 = vsel %vm318, %v2475, 0
      %2511 = vmatprep.subr.bf16.mxu0 0
      %2512 = vmatpush1.bf16.msra.mxu0 0
      %2513 = vmatprep.subr.bf16.mxu0 0
      %2514 = vmatpush1.bf16.msra.mxu0 0
      %2515 = vmatprep.subr.bf16.mxu0 0
      %2516 = vmatpush1.bf16.msra.mxu0 0
      %2517 = vmatprep.subr.bf16.mxu0 0
      %2518 = vmatpush1.bf16.msra.mxu0 0
      %2519 = vmatprep.subr.bf16.mxu0 0
      %2520 = vmatpush1.bf16.msra.mxu0 0
      %2521 = vmatprep.subr.bf16.mxu0 0
      %2522 = vmatpush1.bf16.msra.mxu0 0
      %2523 = vmatprep.subr.bf16.mxu0 0
      %2524 = vmatpush1.bf16.msra.mxu0 0
      %2525 = vmatprep.subr.bf16.mxu0 0
      %2526 = vmatpush1.bf16.msra.mxu0 %v2509
      %2527 = vmatprep.subr.bf16.mxu0 0
      %2528 = vmatpush2.bf16.msra.mxu0 0
      %2529 = vmatprep.subr.bf16.mxu0 0
      %2530 = vmatpush2.bf16.msra.mxu0 0
      %2531 = vmatprep.subr.bf16.mxu0 0
      %2532 = vmatpush2.bf16.msra.mxu0 0
      %2533 = vmatprep.subr.bf16.mxu0 0
      %2534 = vmatpush2.bf16.msra.mxu0 0
      %2535 = vmatprep.subr.bf16.mxu0 0
      %2536 = vmatpush2.bf16.msra.mxu0 0
      %2537 = vmatprep.subr.bf16.mxu0 0
      %2538 = vmatpush2.bf16.msra.mxu0 0
      %2539 = vmatprep.subr.bf16.mxu0 0
      %2540 = vmatpush2.bf16.msra.mxu0 0
      %2541 = vmatprep.subr.bf16.mxu0 0
      %2542 = vmatpush2.bf16.msra.mxu0 0
      %2543 = vmatprep.mubr.bf16.mxu0 0
      %2544 = vmatmul.mubr.bf16.gmra.mxu0 %v2497
      %v2545 = vpop.f32.mrf.mxu0
      %v2546 = vadd.f32 0.0, %v2545
      %v2547 = vpop.f32.mrf.mxu0
      %v2548 = vpop.f32.mrf.mxu0
      %v2549 = vadd.f32 0.0, %v2548
      %v2550 = vpop.f32.mrf.mxu0
      %2551 = vmatprep.mubr.bf16.mxu0 0
      %2552 = vmatmul.mubr.bf16.gmra.mxu0 %v2500
      %v2553 = vpop.f32.mrf.mxu0
      %v2554 = vadd.f32 0.0, %v2553
      %v2555 = vpop.f32.mrf.mxu0
      %v2556 = vpop.f32.mrf.mxu0
      %v2557 = vadd.f32 0.0, %v2556
      %v2558 = vpop.f32.mrf.mxu0
      %2559 = vmatprep.mubr.bf16.mxu0 0
      %2560 = vmatmul.mubr.bf16.gmra.mxu0 %v2503
      %v2561 = vpop.f32.mrf.mxu0
      %v2562 = vadd.f32 0.0, %v2561
      %v2563 = vpop.f32.mrf.mxu0
      %v2564 = vpop.f32.mrf.mxu0
      %v2565 = vadd.f32 0.0, %v2564
      %v2566 = vpop.f32.mrf.mxu0
      %2567 = vmatprep.mubr.bf16.mxu0 0
      %2568 = vmatmul.mubr.bf16.gmra.mxu0 %v2506
      %v2569 = vpop.f32.mrf.mxu0
      %v2570 = vadd.f32 0.0, %v2569
      %v2571 = vpop.f32.mrf.mxu0
      %v2572 = vpop.f32.mrf.mxu0
      %v2573 = vadd.f32 0.0, %v2572
      %v2574 = vpop.f32.mrf.mxu0
      %2575 = vdwg.mxu0
      %v2576 = vadd.f32 %v2457, %v2546
      %v2577 = vadd.f32 %v2458, %v2549
      %v2578 = vadd.f32 %v2459, %v2554
      %v2579 = vadd.f32 %v2460, %v2557
      %v2580 = vadd.f32 %v2461, %v2562
      %v2581 = vadd.f32 %v2462, %v2565
      %v2582 = vadd.f32 %v2463, %v2570
      %v2583 = vadd.f32 %v2464, %v2573
      %v2584 = vld [vmem:[%s2346] sm:$0xf]
      %v2585 = vld [vmem:[%s2346 + $0x4] sm:$0x1]
      %v2586 = vld [vmem:[%s2346 + $0x8] sm:$0xf]
      %v2587 = vld [vmem:[%s2346 + $0xc] sm:$0x1]
      %v2588 = vld [vmem:[%s2346 + $0x10] sm:$0xf]
      %v2589 = vld [vmem:[%s2346 + $0x14] sm:$0x1]
      %v2590 = vld [vmem:[%s2346 + $0x18] sm:$0xf]
      %v2591 = vld [vmem:[%s2346 + $0x1c] sm:$0x1]
      %v2592 = vld [vmem:[%s2346 + $0x20] sm:$0xf]
      %v2593 = vld [vmem:[%s2346 + $0x24] sm:$0x1]
      %v2594 = vld [vmem:[%s2346 + $0x28] sm:$0xf]
      %v2595 = vld [vmem:[%s2346 + $0x2c] sm:$0x1]
      %v2596 = vld [vmem:[%s2346 + $0x30] sm:$0xf]
      %v2597 = vld [vmem:[%s2346 + $0x34] sm:$0x1]
      %v2598 = vld [vmem:[%s2346 + $0x38] sm:$0xf]
      %v2599 = vld [vmem:[%s2346 + $0x3c] sm:$0x1]
      %v2601 = vshrl.u32 %v2584, 16
      %v2603 = vrot.slane %v2601, 4
      %v2604 = vshll.u32 %v2584, 16
      %v2606 = vrot.slane %v2604, 5
      %v2607 = vor.u32 %v2603, %v2606
      %v2608 = vrot.slane %v2607, 4
      %v2610 = vshll.u32 %v2585, 16
      %v2612 = vrot.slane %v2610, 5
      %v2613 = vsel %vm505, %v2608, %v2612
      %v2615 = vshrl.u32 %v2586, 16
      %v2617 = vrot.slane %v2615, 4
      %v2618 = vshll.u32 %v2586, 16
      %v2620 = vrot.slane %v2618, 5
      %v2621 = vor.u32 %v2617, %v2620
      %v2622 = vrot.slane %v2621, 4
      %v2624 = vshll.u32 %v2587, 16
      %v2626 = vrot.slane %v2624, 5
      %v2627 = vsel %vm505, %v2622, %v2626
      %v2629 = vshrl.u32 %v2588, 16
      %v2631 = vrot.slane %v2629, 4
      %v2632 = vshll.u32 %v2588, 16
      %v2634 = vrot.slane %v2632, 5
      %v2635 = vor.u32 %v2631, %v2634
      %v2636 = vrot.slane %v2635, 4
      %v2638 = vshll.u32 %v2589, 16
      %v2640 = vrot.slane %v2638, 5
      %v2641 = vsel %vm505, %v2636, %v2640
      %v2643 = vshrl.u32 %v2590, 16
      %v2645 = vrot.slane %v2643, 4
      %v2646 = vshll.u32 %v2590, 16
      %v2648 = vrot.slane %v2646, 5
      %v2649 = vor.u32 %v2645, %v2648
      %v2650 = vrot.slane %v2649, 4
      %v2652 = vshll.u32 %v2591, 16
      %v2654 = vrot.slane %v2652, 5
      %v2655 = vsel %vm505, %v2650, %v2654
      %v2657 = vshrl.u32 %v2592, 16
      %v2659 = vrot.slane %v2657, 4
      %v2660 = vshll.u32 %v2592, 16
      %v2662 = vrot.slane %v2660, 5
      %v2663 = vor.u32 %v2659, %v2662
      %v2664 = vrot.slane %v2663, 4
      %v2666 = vshll.u32 %v2593, 16
      %v2668 = vrot.slane %v2666, 5
      %v2669 = vsel %vm505, %v2664, %v2668
      %v2671 = vshrl.u32 %v2594, 16
      %v2673 = vrot.slane %v2671, 4
      %v2674 = vshll.u32 %v2594, 16
      %v2676 = vrot.slane %v2674, 5
      %v2677 = vor.u32 %v2673, %v2676
      %v2678 = vrot.slane %v2677, 4
      %v2680 = vshll.u32 %v2595, 16
      %v2682 = vrot.slane %v2680, 5
      %v2683 = vsel %vm505, %v2678, %v2682
      %v2685 = vshrl.u32 %v2596, 16
      %v2687 = vrot.slane %v2685, 4
      %v2688 = vshll.u32 %v2596, 16
      %v2690 = vrot.slane %v2688, 5
      %v2691 = vor.u32 %v2687, %v2690
      %v2692 = vrot.slane %v2691, 4
      %v2694 = vshll.u32 %v2597, 16
      %v2696 = vrot.slane %v2694, 5
      %v2697 = vsel %vm505, %v2692, %v2696
      %v2699 = vshrl.u32 %v2598, 16
      %v2701 = vrot.slane %v2699, 4
      %v2702 = vshll.u32 %v2598, 16
      %v2704 = vrot.slane %v2702, 5
      %v2705 = vor.u32 %v2701, %v2704
      %v2706 = vrot.slane %v2705, 4
      %v2708 = vshll.u32 %v2599, 16
      %v2710 = vrot.slane %v2708, 5
      %v2711 = vsel %vm505, %v2706, %v2710
      %s2712 = scalar_lea.vmem %s247, 28
      %v2713 = vld [vmem:[%s2712] sm:$0x3]
      %v2714 = vunpack.c.l.b16 %v2613
      %v2715 = vunpack.c.l.b16 %v2627
      %v2716 = vunpack.c.l.b16 %v2641
      %v2717 = vunpack.c.l.b16 %v2655
      %v2718 = vunpack.c.l.b16 %v2669
      %v2719 = vunpack.c.l.b16 %v2683
      %v2720 = vunpack.c.l.b16 %v2697
      %v2721 = vunpack.c.l.b16 %v2711
      %v2722 = vpack.c.b16 %v2715, %v2714
      %v2723 = vpack.c.b16 %v2717, %v2716
      %v2724 = vpack.c.b16 %v2719, %v2718
      %v2725 = vpack.c.b16 %v2721, %v2720
      %v2727 = vsel %vm305, %v2722, 0
      %v2730 = vsel %vm305, %v2723, 0
      %v2733 = vsel %vm305, %v2724, 0
      %v2736 = vsel %vm305, %v2725, 0
      %v2739 = vsel %vm318, %v2713, 0
      %2741 = vmatprep.subr.bf16.mxu0 0
      %2742 = vmatpush1.bf16.msra.mxu0 0
      %2743 = vmatprep.subr.bf16.mxu0 0
      %2744 = vmatpush1.bf16.msra.mxu0 0
      %2745 = vmatprep.subr.bf16.mxu0 0
      %2746 = vmatpush1.bf16.msra.mxu0 0
      %2747 = vmatprep.subr.bf16.mxu0 0
      %2748 = vmatpush1.bf16.msra.mxu0 0
      %2749 = vmatprep.subr.bf16.mxu0 0
      %2750 = vmatpush1.bf16.msra.mxu0 0
      %2751 = vmatprep.subr.bf16.mxu0 0
      %2752 = vmatpush1.bf16.msra.mxu0 0
      %2753 = vmatprep.subr.bf16.mxu0 0
      %2754 = vmatpush1.bf16.msra.mxu0 0
      %2755 = vmatprep.subr.bf16.mxu0 0
      %2756 = vmatpush1.bf16.msra.mxu0 %v2739
      %2757 = vmatprep.subr.bf16.mxu0 0
      %2758 = vmatpush2.bf16.msra.mxu0 0
      %2759 = vmatprep.subr.bf16.mxu0 0
      %2760 = vmatpush2.bf16.msra.mxu0 0
      %2761 = vmatprep.subr.bf16.mxu0 0
      %2762 = vmatpush2.bf16.msra.mxu0 0
      %2763 = vmatprep.subr.bf16.mxu0 0
      %2764 = vmatpush2.bf16.msra.mxu0 0
      %2765 = vmatprep.subr.bf16.mxu0 0
      %2766 = vmatpush2.bf16.msra.mxu0 0
      %2767 = vmatprep.subr.bf16.mxu0 0
      %2768 = vmatpush2.bf16.msra.mxu0 0
      %2769 = vmatprep.subr.bf16.mxu0 0
      %2770 = vmatpush2.bf16.msra.mxu0 0
      %2771 = vmatprep.subr.bf16.mxu0 0
      %2772 = vmatpush2.bf16.msra.mxu0 0
      %2773 = vmatprep.mubr.bf16.mxu0 0
      %2774 = vmatmul.mubr.bf16.gmra.mxu0 %v2727
      %v2775 = vpop.f32.mrf.mxu0
      %v2776 = vadd.f32 0.0, %v2775
      %v2777 = vpop.f32.mrf.mxu0
      %v2778 = vpop.f32.mrf.mxu0
      %v2779 = vadd.f32 0.0, %v2778
      %v2780 = vpop.f32.mrf.mxu0
      %2781 = vmatprep.mubr.bf16.mxu0 0
      %2782 = vmatmul.mubr.bf16.gmra.mxu0 %v2730
      %v2783 = vpop.f32.mrf.mxu0
      %v2784 = vadd.f32 0.0, %v2783
      %v2785 = vpop.f32.mrf.mxu0
      %v2786 = vpop.f32.mrf.mxu0
      %v2787 = vadd.f32 0.0, %v2786
      %v2788 = vpop.f32.mrf.mxu0
      %2789 = vmatprep.mubr.bf16.mxu0 0
      %2790 = vmatmul.mubr.bf16.gmra.mxu0 %v2733
      %v2791 = vpop.f32.mrf.mxu0
      %v2792 = vadd.f32 0.0, %v2791
      %v2793 = vpop.f32.mrf.mxu0
      %v2794 = vpop.f32.mrf.mxu0
      %v2795 = vadd.f32 0.0, %v2794
      %v2796 = vpop.f32.mrf.mxu0
      %2797 = vmatprep.mubr.bf16.mxu0 0
      %2798 = vmatmul.mubr.bf16.gmra.mxu0 %v2736
      %v2799 = vpop.f32.mrf.mxu0
      %v2800 = vadd.f32 0.0, %v2799
      %v2801 = vpop.f32.mrf.mxu0
      %v2802 = vpop.f32.mrf.mxu0
      %v2803 = vadd.f32 0.0, %v2802
      %v2804 = vpop.f32.mrf.mxu0
      %2805 = vdwg.mxu0
      %v2806 = vadd.f32 %v2576, %v2776
      %v2807 = vadd.f32 %v2577, %v2779
      %v2808 = vadd.f32 %v2578, %v2784
      %v2809 = vadd.f32 %v2579, %v2787
      %v2810 = vadd.f32 %v2580, %v2792
      %v2811 = vadd.f32 %v2581, %v2795
      %v2812 = vadd.f32 %v2582, %v2800
      %v2813 = vadd.f32 %v2583, %v2803
      %v2814 = vld [vmem:[%s2465] sm:$0xf]
      %v2815 = vld [vmem:[%s2465 + $0x4] sm:$0x1]
      %v2816 = vld [vmem:[%s2465 + $0x8] sm:$0xf]
      %v2817 = vld [vmem:[%s2465 + $0xc] sm:$0x1]
      %v2818 = vld [vmem:[%s2465 + $0x10] sm:$0xf]
      %v2819 = vld [vmem:[%s2465 + $0x14] sm:$0x1]
      %v2820 = vld [vmem:[%s2465 + $0x18] sm:$0xf]
      %v2821 = vld [vmem:[%s2465 + $0x1c] sm:$0x1]
      %v2822 = vld [vmem:[%s2465 + $0x20] sm:$0xf]
      %v2823 = vld [vmem:[%s2465 + $0x24] sm:$0x1]
      %v2824 = vld [vmem:[%s2465 + $0x28] sm:$0xf]
      %v2825 = vld [vmem:[%s2465 + $0x2c] sm:$0x1]
      %v2826 = vld [vmem:[%s2465 + $0x30] sm:$0xf]
      %v2827 = vld [vmem:[%s2465 + $0x34] sm:$0x1]
      %v2828 = vld [vmem:[%s2465 + $0x38] sm:$0xf]
      %v2829 = vld [vmem:[%s2465 + $0x3c] sm:$0x1]
      %v2831 = vshrl.u32 %v2814, 16
      %v2833 = vrot.slane %v2831, 4
      %v2834 = vshll.u32 %v2814, 16
      %v2836 = vrot.slane %v2834, 5
      %v2837 = vor.u32 %v2833, %v2836
      %v2838 = vrot.slane %v2837, 4
      %v2840 = vshll.u32 %v2815, 16
      %v2842 = vrot.slane %v2840, 5
      %v2843 = vsel %vm505, %v2838, %v2842
      %v2845 = vshrl.u32 %v2816, 16
      %v2847 = vrot.slane %v2845, 4
      %v2848 = vshll.u32 %v2816, 16
      %v2850 = vrot.slane %v2848, 5
      %v2851 = vor.u32 %v2847, %v2850
      %v2852 = vrot.slane %v2851, 4
      %v2854 = vshll.u32 %v2817, 16
      %v2856 = vrot.slane %v2854, 5
      %v2857 = vsel %vm505, %v2852, %v2856
      %v2859 = vshrl.u32 %v2818, 16
      %v2861 = vrot.slane %v2859, 4
      %v2862 = vshll.u32 %v2818, 16
      %v2864 = vrot.slane %v2862, 5
      %v2865 = vor.u32 %v2861, %v2864
      %v2866 = vrot.slane %v2865, 4
      %v2868 = vshll.u32 %v2819, 16
      %v2870 = vrot.slane %v2868, 5
      %v2871 = vsel %vm505, %v2866, %v2870
      %v2873 = vshrl.u32 %v2820, 16
      %v2875 = vrot.slane %v2873, 4
      %v2876 = vshll.u32 %v2820, 16
      %v2878 = vrot.slane %v2876, 5
      %v2879 = vor.u32 %v2875, %v2878
      %v2880 = vrot.slane %v2879, 4
      %v2882 = vshll.u32 %v2821, 16
      %v2884 = vrot.slane %v2882, 5
      %v2885 = vsel %vm505, %v2880, %v2884
      %v2887 = vshrl.u32 %v2822, 16
      %v2889 = vrot.slane %v2887, 4
      %v2890 = vshll.u32 %v2822, 16
      %v2892 = vrot.slane %v2890, 5
      %v2893 = vor.u32 %v2889, %v2892
      %v2894 = vrot.slane %v2893, 4
      %v2896 = vshll.u32 %v2823, 16
      %v2898 = vrot.slane %v2896, 5
      %v2899 = vsel %vm505, %v2894, %v2898
      %v2901 = vshrl.u32 %v2824, 16
      %v2903 = vrot.slane %v2901, 4
      %v2904 = vshll.u32 %v2824, 16
      %v2906 = vrot.slane %v2904, 5
      %v2907 = vor.u32 %v2903, %v2906
      %v2908 = vrot.slane %v2907, 4
      %v2910 = vshll.u32 %v2825, 16
      %v2912 = vrot.slane %v2910, 5
      %v2913 = vsel %vm505, %v2908, %v2912
      %v2915 = vshrl.u32 %v2826, 16
      %v2917 = vrot.slane %v2915, 4
      %v2918 = vshll.u32 %v2826, 16
      %v2920 = vrot.slane %v2918, 5
      %v2921 = vor.u32 %v2917, %v2920
      %v2922 = vrot.slane %v2921, 4
      %v2924 = vshll.u32 %v2827, 16
      %v2926 = vrot.slane %v2924, 5
      %v2927 = vsel %vm505, %v2922, %v2926
      %v2929 = vshrl.u32 %v2828, 16
      %v2931 = vrot.slane %v2929, 4
      %v2932 = vshll.u32 %v2828, 16
      %v2934 = vrot.slane %v2932, 5
      %v2935 = vor.u32 %v2931, %v2934
      %v2936 = vrot.slane %v2935, 4
      %v2938 = vshll.u32 %v2829, 16
      %v2940 = vrot.slane %v2938, 5
      %v2941 = vsel %vm505, %v2936, %v2940
      %s2942 = scalar_lea.vmem %s247, 30
      %v2943 = vld [vmem:[%s2942] sm:$0x3]
      %v2944 = vunpack.c.l.b16 %v2843
      %v2945 = vunpack.c.l.b16 %v2857
      %v2946 = vunpack.c.l.b16 %v2871
      %v2947 = vunpack.c.l.b16 %v2885
      %v2948 = vunpack.c.l.b16 %v2899
      %v2949 = vunpack.c.l.b16 %v2913
      %v2950 = vunpack.c.l.b16 %v2927
      %v2951 = vunpack.c.l.b16 %v2941
      %v2952 = vpack.c.b16 %v2945, %v2944
      %v2953 = vpack.c.b16 %v2947, %v2946
      %v2954 = vpack.c.b16 %v2949, %v2948
      %v2955 = vpack.c.b16 %v2951, %v2950
      %v2957 = vsel %vm305, %v2952, 0
      %v2960 = vsel %vm305, %v2953, 0
      %v2963 = vsel %vm305, %v2954, 0
      %v2966 = vsel %vm305, %v2955, 0
      %v2969 = vsel %vm318, %v2943, 0
      %2971 = vmatprep.subr.bf16.mxu0 0
      %2972 = vmatpush1.bf16.msra.mxu0 0
      %2973 = vmatprep.subr.bf16.mxu0 0
      %2974 = vmatpush1.bf16.msra.mxu0 0
      %2975 = vmatprep.subr.bf16.mxu0 0
      %2976 = vmatpush1.bf16.msra.mxu0 0
      %2977 = vmatprep.subr.bf16.mxu0 0
      %2978 = vmatpush1.bf16.msra.mxu0 0
      %2979 = vmatprep.subr.bf16.mxu0 0
      %2980 = vmatpush1.bf16.msra.mxu0 0
      %2981 = vmatprep.subr.bf16.mxu0 0
      %2982 = vmatpush1.bf16.msra.mxu0 0
      %2983 = vmatprep.subr.bf16.mxu0 0
      %2984 = vmatpush1.bf16.msra.mxu0 0
      %2985 = vmatprep.subr.bf16.mxu0 0
      %2986 = vmatpush1.bf16.msra.mxu0 %v2969
      %2987 = vmatprep.subr.bf16.mxu0 0
      %2988 = vmatpush2.bf16.msra.mxu0 0
      %2989 = vmatprep.subr.bf16.mxu0 0
      %2990 = vmatpush2.bf16.msra.mxu0 0
      %2991 = vmatprep.subr.bf16.mxu0 0
      %2992 = vmatpush2.bf16.msra.mxu0 0
      %2993 = vmatprep.subr.bf16.mxu0 0
      %2994 = vmatpush2.bf16.msra.mxu0 0
      %2995 = vmatprep.subr.bf16.mxu0 0
      %2996 = vmatpush2.bf16.msra.mxu0 0
      %2997 = vmatprep.subr.bf16.mxu0 0
      %2998 = vmatpush2.bf16.msra.mxu0 0
      %2999 = vmatprep.subr.bf16.mxu0 0
      %3000 = vmatpush2.bf16.msra.mxu0 0
      %3001 = vmatprep.subr.bf16.mxu0 0
      %3002 = vmatpush2.bf16.msra.mxu0 0
      %3003 = vmatprep.mubr.bf16.mxu0 0
      %3004 = vmatmul.mubr.bf16.gmra.mxu0 %v2957
      %v3005 = vpop.f32.mrf.mxu0
      %v3006 = vadd.f32 0.0, %v3005
      %v3007 = vpop.f32.mrf.mxu0
      %v3008 = vpop.f32.mrf.mxu0
      %v3009 = vadd.f32 0.0, %v3008
      %v3010 = vpop.f32.mrf.mxu0
      %3011 = vmatprep.mubr.bf16.mxu0 0
      %3012 = vmatmul.mubr.bf16.gmra.mxu0 %v2960
      %v3013 = vpop.f32.mrf.mxu0
      %v3014 = vadd.f32 0.0, %v3013
      %v3015 = vpop.f32.mrf.mxu0
      %v3016 = vpop.f32.mrf.mxu0
      %v3017 = vadd.f32 0.0, %v3016
      %v3018 = vpop.f32.mrf.mxu0
      %3019 = vmatprep.mubr.bf16.mxu0 0
      %3020 = vmatmul.mubr.bf16.gmra.mxu0 %v2963
      %v3021 = vpop.f32.mrf.mxu0
      %v3022 = vadd.f32 0.0, %v3021
      %v3023 = vpop.f32.mrf.mxu0
      %v3024 = vpop.f32.mrf.mxu0
      %v3025 = vadd.f32 0.0, %v3024
      %v3026 = vpop.f32.mrf.mxu0
      %3027 = vmatprep.mubr.bf16.mxu0 0
      %3028 = vmatmul.mubr.bf16.gmra.mxu0 %v2966
      %v3029 = vpop.f32.mrf.mxu0
      %v3030 = vadd.f32 0.0, %v3029
      %v3031 = vpop.f32.mrf.mxu0
      %v3032 = vpop.f32.mrf.mxu0
      %v3033 = vadd.f32 0.0, %v3032
      %v3034 = vpop.f32.mrf.mxu0
      %3035 = vdwg.mxu0
      %v3036 = vadd.f32 %v2806, %v3006
      %v3037 = vadd.f32 %v2807, %v3009
      %v3038 = vadd.f32 %v2808, %v3014
      %v3039 = vadd.f32 %v2809, %v3017
      %v3040 = vadd.f32 %v2810, %v3022
      %v3041 = vadd.f32 %v2811, %v3025
      %v3042 = vadd.f32 %v2812, %v3030
      %v3043 = vadd.f32 %v2813, %v3033
      %v3044 = vld [vmem:[%s250] sm:$0x1]
      %v3046 = vlaneseq
      %v3047 = vshrl.u32 %v3046, 7
      %v3048 = vsub.s32 0, %v3047
      %v3049 = vrot.slane %v3044, %v3048
      %v3051 = vadd.f32 %v3036, %v3049
      %v3052 = vadd.f32 %v3037, %v3049
      %v3053 = vadd.f32 %v3038, %v3049
      %v3054 = vadd.f32 %v3039, %v3049
      %v3055 = vadd.f32 %v3040, %v3049
      %v3056 = vadd.f32 %v3041, %v3049
      %v3057 = vadd.f32 %v3042, %v3049
      %v3058 = vadd.f32 %v3043, %v3049
      %vm3059 = vcmask 64512
      %3060 = vst.msk [vmem:[%s262] sm:$0xff] %vm3059, %v3051
      %3061 = vst.msk [vmem:[%s262 + $0x8] sm:$0xff] %vm3059, %v3052
      %3062 = vst.msk [vmem:[%s262 + $0x10] sm:$0xff] %vm3059, %v3053
      %3063 = vst.msk [vmem:[%s262 + $0x18] sm:$0xff] %vm3059, %v3054
      %3064 = vst.msk [vmem:[%s262 + $0x20] sm:$0xff] %vm3059, %v3055
      %3065 = vst.msk [vmem:[%s262 + $0x28] sm:$0xff] %vm3059, %v3056
      %3066 = vst.msk [vmem:[%s262 + $0x30] sm:$0xff] %vm3059, %v3057
      %3067 = vst.msk [vmem:[%s262 + $0x38] sm:$0xff] %vm3059, %v3058
      %s3068 = smul.u32 8, %s20
      %p3069 = scmp.lt.s32.totalorder %s19, 1
      %s3070 = scalar_select %p3069, %s19, 1
      %p3071 = scmp.lt.s32.totalorder %s3068, 7
      %s3072 = scalar_select %p3071, %s3068, 7
      %p3073 = scmp.lt.s32.totalorder %s21, 0
      %s3074 = scalar_select %p3073, %s21, 0
      %s3075 = sadd.s32 %s3074, %s3072
      %s3076 = smul.addr %s3070, 8
      %s3077 = sadd.s32 %s3075, %s3076
      %s3078 = smul.addr %s3077, 8
      %s3079 = scalar_lea.vmem %s3, %s3078
      // Predicated region
      $region33: #{dc_down_block2d_pallas.1} parent=31 // pred_check
        %p3080 = pneg %p135
      $region34: #{dc_down_block2d_pallas.1} parent=31 // pred_check_branch
        %3082 = sbr.rel (%p3080) target = $region36
      $region35: #{dc_down_block2d_pallas.1} parent=31 // pred_region
        %s3083 = smul.u32 8, %s20
      $region36: #{dc_down_block2d_pallas.1} parent=31 // pred_fallthru
        _
    $region32: #{dc_down_block2d_pallas.1} parent=5 // pred_fallthru
      _
    %p3084 = scmp.le.s32.totalorder 2, %s9
    // Predicated region
    $region37: #{dc_down_block2d_pallas.1} parent=5 // pred_check
      %p3085 = pneg %p3084
    $region38: #{dc_down_block2d_pallas.1} parent=5 // pred_check_branch
      %3087 = sbr.rel (%p3085) target = $region40
    $region39: #{dc_down_block2d_pallas.1} parent=5 // pred_region
      %s3088 = ssub.s32 %s9, 2
      // Predicated region
      $region41: #{dc_down_block2d_pallas.1} parent=39 // pred_check
        %p3089 = pneg %p141
      $region42: #{dc_down_block2d_pallas.1} parent=39 // pred_check_branch
        %3091 = sbr.rel (%p3089) target = $region44
      $region43: #{dc_down_block2d_pallas.1} parent=39 // pred_region
        %s3092 = smul.u32 8, %s23
        %p3093 = scmp.lt.s32.totalorder %s22, 1
        %s3094 = scalar_select %p3093, %s22, 1
        %p3095 = scmp.lt.s32.totalorder %s3092, 7
        %s3096 = scalar_select %p3095, %s3092, 7
        %p3097 = scmp.lt.s32.totalorder %s24, 0
        %s3098 = scalar_select %p3097, %s24, 0
        %s3099 = sadd.s32 %s3098, %s3096
        %s3100 = smul.addr %s3094, 8
        %s3101 = sadd.s32 %s3099, %s3100
        %s3102 = smul.addr %s3101, 8
        %s3103 = scalar_lea.vmem %s3, %s3102
      $region44: #{dc_down_block2d_pallas.1} parent=39 // pred_fallthru
        _
    $region40: #{dc_down_block2d_pallas.1} parent=5 // pred_fallthru
      _
  $region6: #{dc_down_block2d_pallas.1} parent=0 // loop_footer
    %s13 = sadd.s32 1, %s9
  $region7: #{dc_down_block2d_pallas.1} parent=0 // loop_footer_branch
    %8 = sbr.rel target = $region3
  $region8: #{dc_down_block2d_pallas.1} parent=0 // loop_exit
    _

</llo_original>
